<compile_context>
chip_gen: v7x
topology: tpu7x:2x2x1
jax: 0.10.0
libtpu: 0.0.40
codegen_flags: <defaults>
</compile_context>

<pallas_src>
import functools

import jax
import jax.numpy as jnp
from jax.experimental import pallas as pl
from jax.experimental.pallas import tpu as pltpu

KERNEL_WIDTHS = (3, 4, 5, 6)
MIN_K = min(KERNEL_WIDTHS)
MAX_K = max(KERNEL_WIDTHS)
NUM_FILTERS = 32
FEAT_DIM = NUM_FILTERS * len(KERNEL_WIDTHS)  # 128


def _round_up(x, m):
    return ((x + m - 1) // m) * m


# ----------------------------- Pallas kernel --------------------------------
def _textcnn_kernel(g_ref, w_all_ref, b_all_ref, wc_ref, bc_ref, mask_ref,
                    out_ref, g_scr, *, seq_len, h_real):
    """One grid step = B_TILE samples.

    g_ref:     (B_TILE, C, H)         input dtype (usually f32; cast in-kernel)
    w_all_ref: (H_pad, MAX_K*128)     packed conv weights (offset-major), matmul dtype
    b_all_ref: (1, 128)               packed conv biases (f32)
    wc_ref:    (128, NCLS_PAD)        zero-padded classifier weight, matmul dtype
    bc_ref:    (1, NCLS_PAD)          zero-padded classifier bias (f32)
    mask_ref:  (L, 128)               additive 0 / -1e30 validity mask (f32)
    out_ref:   (B_TILE, NCLS_PAD)     f32 logits (lane-dense)
    g_scr:     (B_TILE, C_pad, H_pad) matmul-dtype staging copy of the G tile
    """
    bt, c_pad, h_pad = g_scr.shape
    L = seq_len - MIN_K + 1

    # --- stage the tile into a zero-padded, lane-aligned, matmul-dtype buffer.
    # Pad regions are re-zeroed every step (a pl.when(i==0) init would be wrong
    # under megacore grid sharding); they are tiny (<=10 rows / <128 lanes).
    if c_pad > seq_len:
        g_scr[:, seq_len:, :] = jnp.zeros(
            (bt, c_pad - seq_len, h_pad), g_scr.dtype)
    if h_pad > h_real:
        g_scr[:, :seq_len, h_real:] = jnp.zeros(
            (bt, seq_len, h_pad - h_real), g_scr.dtype)
    g_scr[:, :seq_len, :h_real] = g_ref[...].astype(g_scr.dtype)

    # --- single fused MXU matmul over all samples / widths / offsets --------
    g = g_scr[...].reshape(bt * c_pad, h_pad)      # c_pad % 8 == 0 -> layout-free
    p = jnp.dot(g, w_all_ref[...], preferred_element_type=jnp.float32)
    p = p.reshape(bt, c_pad, MAX_K * FEAT_DIM)     # (bt, C_pad, 768)

    # --- shift-add of aligned 128-lane blocks (VPU), static slices ----------
    # NOTE: on v5e the non-8-aligned sublane slices below force relayouts; if a
    # bundle dump shows the kernel going vld/vst-bound there, accumulate via a
    # VMEM scratch instead (left as-is pending measurement).
    acc = p[:, 0:L, 0:FEAT_DIM]
    for j in range(1, MAX_K):
        acc = acc + p[:, j:j + L, j * FEAT_DIM:(j + 1) * FEAT_DIM]
    # fold the per-(position, width) validity mask as one more additive term
    acc = acc + mask_ref[...][None]

    feat = jnp.max(acc, axis=1) + b_all_ref[...]   # (bt, 128), f32

    # --- batched classifier, lane-dense output -------------------------------
    out_ref[...] = (jnp.dot(feat.astype(wc_ref.dtype), wc_ref[...],
                            preferred_element_type=jnp.float32)
                    + bc_ref[...])


# ----------------------------- host-side packing ----------------------------
def _pack_params(conv_ws, conv_bs, cls_w, cls_b, h_pad, ncls_pad, matmul_dtype):
    hidden = conv_ws[0].shape[1]
    # TODO(synk): 192 of the 768 columns are structurally zero (offset >= width);
    # a densified 640-column layout would cut ~17% of MXU FLOPs once the kernel
    # is vmatmul-cadence bound at large hidden.
    w_all = jnp.zeros((h_pad, MAX_K * FEAT_DIM), jnp.float32)
    for gi, (k, w) in enumerate(zip(KERNEL_WIDTHS, conv_ws)):
        for j in range(k):
            col = j * FEAT_DIM + gi * NUM_FILTERS
            w_all = w_all.at[:hidden, col:col + NUM_FILTERS].set(
                w[j].astype(jnp.float32))
    b_all = jnp.concatenate(
        [b.reshape(1, NUM_FILTERS).astype(jnp.float32) for b in conv_bs],
        axis=1)                                              # (1, 128)
    ncls = cls_w.shape[1]
    wc = jnp.zeros((FEAT_DIM, ncls_pad), jnp.float32
                   ).at[:, :ncls].set(cls_w.astype(jnp.float32))
    bc = jnp.zeros((1, ncls_pad), jnp.float32
                   ).at[:, :ncls].set(cls_b.reshape(1, ncls).astype(jnp.float32))
    return w_all.astype(matmul_dtype), b_all, wc.astype(matmul_dtype), bc


def _make_valid_mask(C):
    """(L, 128) additive mask: 0 where position t is valid for the lane's width."""
    L = C - MIN_K + 1
    t = jnp.arange(L, dtype=jnp.int32)[:, None]
    width = MIN_K + jnp.arange(FEAT_DIM, dtype=jnp.int32)[None, :] // NUM_FILTERS
    return jnp.where(t <= C - width, 0.0, -1e30).astype(jnp.float32)


def _vmem_capacity_bytes():
    try:
        cap = getattr(pltpu.get_tpu_info(), "vmem_capacity_bytes", None)
        if cap:
            return int(cap)
    except Exception:
        pass
    try:
        kind = jax.devices()[0].device_kind.lower()
    except Exception:
        kind = ""
    if "v5" in kind or "v6" in kind:
        return 128 * 2 ** 20
    return 64 * 2 ** 20            # conservative (v7x: 64 MiB per TensorCore)


# ----------------------------- host wrapper ---------------------------------
def textcnn_head(G, conv_ws, conv_bs, cls_w, cls_b, *,
                 b_tile=None, matmul_dtype=jnp.bfloat16):
    """G: (bsz, C, hidden); returns logits (bsz, ncls) f32.

    matmul_dtype=jnp.bfloat16 (default) keeps f32 accumulation on the MXU.
    Pass jnp.float32 for bit-tight checks (slower: multi-pass MXU decomposition).
    """
    bsz, C, H = G.shape
    if C < MAX_K:
        raise ValueError(f"sequence length C={C} must be >= {MAX_K}")
    ncls = cls_w.shape[1]
    ncls_pad = _round_up(ncls, 128)
    c_pad = _round_up(C + (MAX_K - MIN_K), 8)   # room for the MAX_K-1 shift-adds
    h_pad = _round_up(H, 128)                   # lane-aligned matmul K dimension
    L = C - MIN_K + 1

    # ---- per-generation VMEM budget (v7x: 64 MiB/TC; v5e/v6e: 128 MiB) -----
    phys_vmem = _vmem_capacity_bytes()
    if phys_vmem <= 64 * 2 ** 20:
        vmem_cap, two_core = 48 * 2 ** 20, True    # v7x: 2 TensorCores / chip
    else:
        vmem_cap, two_core = 96 * 2 ** 20, False

    gbytes = jnp.dtype(G.dtype).itemsize
    mbytes = jnp.dtype(matmul_dtype).itemsize
    per_bt = (2 * C * H * gbytes                   # G block (double-buffered)
              + c_pad * h_pad * mbytes             # staging scratch
              + c_pad * MAX_K * FEAT_DIM * 4       # P = G @ W_all (f32, single)
              + 2 * c_pad * FEAT_DIM * 4           # accumulator + slice temps
              + 2 * ncls_pad * 4)                  # output block (double-buffered)
    const_bytes = (2 * h_pad * MAX_K * FEAT_DIM * mbytes   # W_all (worst case dbuf)
                   + 2 * FEAT_DIM * ncls_pad * mbytes      # classifier weight
                   + 2 * L * FEAT_DIM * 4                  # additive mask
                   + 2 * (FEAT_DIM + ncls_pad) * 4)        # biases
    headroom = 6 * 2 ** 20                         # Mosaic internal scratch etc.
    budget = max(per_bt, vmem_cap - const_bytes - headroom)
    cap_bt = max(1, budget // per_bt)

    # ---- batch-tile choice: fill the MXU M dim, respect the VMEM budget ----
    if b_tile is None:
        bt = int(min(bsz, cap_bt))
        if two_core and bsz >= 16:                 # >=2 grid steps -> both TCs busy
            bt = min(bt, max(8, (bsz // 2 // 8) * 8))
    else:
        bt = max(1, int(b_tile))
    if bt >= bsz:
        bt = bsz                                   # block == full batch dim
    else:
        bt = max(8, (bt // 8) * 8)                 # keep (8,128)-legal output blocks
        if bt >= bsz:
            bt = bsz
    bsz_pad = _round_up(bsz, bt)

    # G is fed unpadded & uncast (cast, seq-pad and lane-pad happen in-kernel);
    # the batch dim is only padded when b_tile does not divide it.
    Gp = G if bsz_pad == bsz else jnp.pad(G, ((0, bsz_pad - bsz), (0, 0), (0, 0)))

    w_all, b_all, wc, bc = _pack_params(conv_ws, conv_bs, cls_w, cls_b,
                                        h_pad, ncls_pad, matmul_dtype)
    mask = _make_valid_mask(C)

    est = const_bytes + bt * per_bt + headroom
    vmem_limit = int(min(vmem_cap, max(est, 32 * 2 ** 20)))
    grid = (bsz_pad // bt,)

    kernel = functools.partial(_textcnn_kernel, seq_len=C, h_real=H)

    def _const_spec(shape, pipeline_mode):
        idx = lambda i, _n=len(shape): (0,) * _n
        if pipeline_mode is None:
            return pl.BlockSpec(shape, idx)
        return pl.BlockSpec(shape, idx, pipeline_mode=pipeline_mode)

    def _run(single_buffer_consts):
        pm = (pl.Buffered(1)
              if single_buffer_consts and hasattr(pl, "Buffered") else None)
        return pl.pallas_call(
            kernel,
            out_shape=jax.ShapeDtypeStruct((bsz_pad, ncls_pad), jnp.float32),
            grid_spec=pltpu.PrefetchScalarGridSpec(
                num_scalar_prefetch=0,
                grid=grid,
                in_specs=[
                    pl.BlockSpec((bt, C, H), lambda i: (i, 0, 0)),
                    _const_spec((h_pad, MAX_K * FEAT_DIM), pm),
                    _const_spec((1, FEAT_DIM), pm),
                    _const_spec((FEAT_DIM, ncls_pad), pm),
                    _const_spec((1, ncls_pad), pm),
                    _const_spec((L, FEAT_DIM), pm),
                ],
                out_specs=pl.BlockSpec((bt, ncls_pad), lambda i: (i, 0)),
                scratch_shapes=[pltpu.VMEM((bt, c_pad, h_pad), matmul_dtype)],
            ),
            compiler_params=pltpu.CompilerParams(
                dimension_semantics=("parallel",),
                vmem_limit_bytes=vmem_limit),
        )(Gp, w_all, b_all, wc, bc, mask)

    try:
        out = _run(True)      # constants single-buffered (never re-DMA'd)
    except Exception:
        out = _run(False)     # fall back if pipeline_mode is not supported

    return out[:bsz, :ncls]


def dual_qa_event_type_forward(G_CLS, G_IDF, cls_params, idf_params,
                               matmul_dtype=jnp.bfloat16):
    """Mirrors DualQA_EventType.forward output dict.

    # TODO(synk): SharedEncoder (BERT PLM), FlowAttention and SharedProjection
    # are external modules not defined in the reference source; this wrapper
    # consumes the projected representations G_CLS / G_IDF (bsz, C, hidden)
    # directly and runs the Pallas TextCNN heads on them.
    """
    if G_CLS is None and G_IDF is None:
        raise ValueError("CLS and IDF inputs cannot both be None")
    out = {'event_types_pred': None, 'event_types_identified': None}
    if G_CLS is not None:
        out['event_types_pred'] = textcnn_head(G_CLS, *cls_params,
                                               matmul_dtype=matmul_dtype)
    if G_IDF is not None:
        out['event_types_identified'] = textcnn_head(G_IDF, *idf_params,
                                                     matmul_dtype=matmul_dtype)
    return out


# ------------------------- deterministic param init -------------------------
def init_head_params(key, hidden, ncls):
    keys = jax.random.split(key, 2 * len(KERNEL_WIDTHS) + 1)
    conv_ws, conv_bs = [], []
    for i, k in enumerate(KERNEL_WIDTHS):
        fan_in = float(k * hidden)
        bound = 1.0 / (fan_in ** 0.5)
        w = jax.random.uniform(keys[2 * i], (NUM_FILTERS, k, hidden),
                               jnp.float32, -bound, bound)     # torch (O, kh, kw)
        b = jax.random.uniform(keys[2 * i + 1], (NUM_FILTERS,),
                               jnp.float32, -bound, bound)
        conv_ws.append(jnp.transpose(w, (1, 2, 0)))            # -> (k, hidden, 32)
        conv_bs.append(b.reshape(1, NUM_FILTERS))
    # classifier: xavier_uniform_ weight, zero bias (as in init_weights)
    limit = (6.0 / (FEAT_DIM + ncls)) ** 0.5
    cls_w = jax.random.uniform(keys[-1], (ncls, FEAT_DIM),
                               jnp.float32, -limit, limit)
    cls_b = jnp.zeros((ncls,), jnp.float32)
    return conv_ws, conv_bs, jnp.transpose(cls_w), cls_b.reshape(1, ncls)


# --------------------------- pure-JAX reference ------------------------------
def textcnn_ref(G, conv_ws, conv_bs, cls_w, cls_b):
    bsz, C, H = G.shape
    feats = []
    for k, w, bias in zip(KERNEL_WIDTHS, conv_ws, conv_bs):
        L = C - k + 1
        acc = jnp.zeros((bsz, L, NUM_FILTERS), jnp.float32)
        for j in range(k):
            acc = acc + jnp.einsum('bch,hf->bcf', G[:, j:j + L, :], w[j])
        acc = acc + bias[None]
        feats.append(jnp.max(acc, axis=1))
    feat = jnp.concatenate(feats, axis=-1)
    return feat @ cls_w + cls_b


# --------------------------------- main --------------------------------------
if __name__ == "__main__":
    bsz, C, hidden = 2, 16, 32
    n_event_types = 10   # stand-in for len(EE_settings.event_types_full)

    key = jax.random.PRNGKey(0)
    k_g1, k_g2, k_cls, k_idf = jax.random.split(key, 4)

    # projected representations (what SharedProjection would produce)
    G_CLS = jax.random.normal(k_g1, (bsz, C, hidden), jnp.float32)
    G_IDF = jax.random.normal(k_g2, (bsz, C, hidden), jnp.float32)

    cls_params = init_head_params(k_cls, hidden, n_event_types)  # EventTypeClassifier
    idf_params = init_head_params(k_idf, hidden, 2)              # EventTypeIdentifier

    # default path: bf16 MXU operands with f32 accumulation
    out = dual_qa_event_type_forward(G_CLS, G_IDF, cls_params, idf_params)
    pred = jax.block_until_ready(out['event_types_pred'])
    ident = jax.block_until_ready(out['event_types_identified'])

    ref_pred = textcnn_ref(G_CLS, *cls_params)
    ref_ident = textcnn_ref(G_IDF, *idf_params)
    assert pred.shape == (bsz, n_event_types)
    assert ident.shape == (bsz, 2)
    # loose tolerance: operands are truncated to bf16 before the conv matmul
    assert jnp.allclose(pred, ref_pred, atol=1e-1, rtol=1e-1)
    assert jnp.allclose(ident, ref_ident, atol=1e-1, rtol=1e-1)

    # bit-tight check of the kernel structure with f32 matmul operands
    pred_f32 = jax.block_until_ready(
        textcnn_head(G_CLS, *cls_params, matmul_dtype=jnp.float32))
    ident_f32 = jax.block_until_ready(
        textcnn_head(G_IDF, *idf_params, matmul_dtype=jnp.float32))
    assert jnp.allclose(pred_f32, ref_pred, atol=1e-4, rtol=1e-4)
    assert jnp.allclose(ident_f32, ref_ident, atol=1e-4, rtol=1e-4)

    print("KERNEL_OK")
</pallas_src>

<mosaic_0001>
module attributes {stable_mosaic.version = 11 : i64} {
  func.func @_textcnn_kernel(%arg0: i32, %arg1: memref<2x16x32xf32, #tpu.memory_space<vmem>>, %arg2: memref<128x768xbf16, #tpu.memory_space<vmem>>, %arg3: memref<1x128xf32, #tpu.memory_space<vmem>>, %arg4: memref<128x128xbf16, #tpu.memory_space<vmem>>, %arg5: memref<1x128xf32, #tpu.memory_space<vmem>>, %arg6: memref<14x128xf32, #tpu.memory_space<vmem>>, %arg7: memref<2x128xf32, #tpu.memory_space<vmem>>, %arg8: memref<2x24x128xbf16, #tpu.memory_space<vmem>>) attributes {dimension_semantics = [#tpu.dimension_semantics<parallel>], iteration_bounds = array<i64: 1>, scalar_prefetch = 0 : i64, scratch_operands = 1 : i64, tpu.core_type = #tpu.core_type<tc>, window_params = [{transform_indices = @transform_0, window_bounds = array<i64: 2, 16, 32>}, {pipeline_mode = #tpu.pipeline_mode<synchronous>, transform_indices = @transform_1, window_bounds = array<i64: 128, 768>}, {pipeline_mode = #tpu.pipeline_mode<synchronous>, transform_indices = @transform_2, window_bounds = array<i64: 1, 128>}, {pipeline_mode = #tpu.pipeline_mode<synchronous>, transform_indices = @transform_3, window_bounds = array<i64: 128, 128>}, {pipeline_mode = #tpu.pipeline_mode<synchronous>, transform_indices = @transform_4, window_bounds = array<i64: 1, 128>}, {pipeline_mode = #tpu.pipeline_mode<synchronous>, transform_indices = @transform_5, window_bounds = array<i64: 14, 128>}, {transform_indices = @transform_6, window_bounds = array<i64: 2, 128>}]} {
    %cst = arith.constant 0.000000e+00 : bf16
    %0 = vector.broadcast %cst : bf16 to vector<2x8x128xbf16>
    %c0 = arith.constant 0 : index
    %c16 = arith.constant 16 : index
    %c0_0 = arith.constant 0 : index
    %1 = vector.load %arg8[%c0, %c16, %c0_0] : memref<2x24x128xbf16, #tpu.memory_space<vmem>>, vector<2x8x128xbf16>
    tpu.vector_store %arg8[%c0, %c16, %c0_0], %0 {strides = array<i32>} : memref<2x24x128xbf16, #tpu.memory_space<vmem>>, vector<2x8x128xbf16>,
    %cst_1 = arith.constant 0.000000e+00 : bf16
    %2 = vector.broadcast %cst_1 : bf16 to vector<2x16x96xbf16>
    %c0_2 = arith.constant 0 : index
    %c0_3 = arith.constant 0 : index
    %c32 = arith.constant 32 : index
    %3 = vector.load %arg8[%c0_2, %c0_3, %c32] : memref<2x24x128xbf16, #tpu.memory_space<vmem>>, vector<2x16x96xbf16>
    tpu.vector_store %arg8[%c0_2, %c0_3, %c32], %2 {strides = array<i32>} : memref<2x24x128xbf16, #tpu.memory_space<vmem>>, vector<2x16x96xbf16>,
    %c0_4 = arith.constant 0 : index
    %c0_5 = arith.constant 0 : index
    %c0_6 = arith.constant 0 : index
    %4 = vector.load %arg1[%c0_4, %c0_5, %c0_6] : memref<2x16x32xf32, #tpu.memory_space<vmem>>, vector<2x16x32xf32>
    %5 = arith.truncf %4 : vector<2x16x32xf32> to vector<2x16x32xbf16>
    %c0_7 = arith.constant 0 : index
    %c0_8 = arith.constant 0 : index
    %c0_9 = arith.constant 0 : index
    %6 = vector.load %arg8[%c0_7, %c0_8, %c0_9] : memref<2x24x128xbf16, #tpu.memory_space<vmem>>, vector<2x16x32xbf16>
    tpu.vector_store %arg8[%c0_7, %c0_8, %c0_9], %5 {strides = array<i32>} : memref<2x24x128xbf16, #tpu.memory_space<vmem>>, vector<2x16x32xbf16>,
    %c0_10 = arith.constant 0 : index
    %c0_11 = arith.constant 0 : index
    %c0_12 = arith.constant 0 : index
    %7 = vector.load %arg8[%c0_10, %c0_11, %c0_12] : memref<2x24x128xbf16, #tpu.memory_space<vmem>>, vector<2x24x128xbf16>
    %8 = vector.shape_cast %7 : vector<2x24x128xbf16> to vector<48x128xbf16>
    %c0_13 = arith.constant 0 : index
    %c0_14 = arith.constant 0 : index
    %9 = vector.load %arg2[%c0_13, %c0_14] : memref<128x768xbf16, #tpu.memory_space<vmem>>, vector<128x768xbf16>
    %cst_15 = arith.constant dense<0.000000e+00> : vector<48x768xf32>
    %10 = tpu.matmul %8, %9, %cst_15 {dimension_numbers = #tpu.dot_dimension_numbers<[1], [0], [0], [1], [0, 0, 1, 1], [], []>} : vector<48x128xbf16>, vector<128x768xbf16>, vector<48x768xf32> -> vector<48x768xf32>
    %11 = vector.shape_cast %10 : vector<48x768xf32> to vector<2x24x768xf32>
    %12 = vector.extract_strided_slice %11 {offsets = [0, 0, 0], sizes = [2, 14, 128], strides = [1, 1, 1]} : vector<2x24x768xf32> to vector<2x14x128xf32>
    %13 = vector.extract_strided_slice %11 {offsets = [0, 1, 128], sizes = [2, 14, 128], strides = [1, 1, 1]} : vector<2x24x768xf32> to vector<2x14x128xf32>
    %14 = arith.addf %12, %13 : vector<2x14x128xf32>
    %15 = vector.extract_strided_slice %11 {offsets = [0, 2, 256], sizes = [2, 14, 128], strides = [1, 1, 1]} : vector<2x24x768xf32> to vector<2x14x128xf32>
    %16 = arith.addf %14, %15 : vector<2x14x128xf32>
    %17 = vector.extract_strided_slice %11 {offsets = [0, 3, 384], sizes = [2, 14, 128], strides = [1, 1, 1]} : vector<2x24x768xf32> to vector<2x14x128xf32>
    %18 = arith.addf %16, %17 : vector<2x14x128xf32>
    %19 = vector.extract_strided_slice %11 {offsets = [0, 4, 512], sizes = [2, 14, 128], strides = [1, 1, 1]} : vector<2x24x768xf32> to vector<2x14x128xf32>
    %20 = arith.addf %18, %19 : vector<2x14x128xf32>
    %21 = vector.extract_strided_slice %11 {offsets = [0, 5, 640], sizes = [2, 14, 128], strides = [1, 1, 1]} : vector<2x24x768xf32> to vector<2x14x128xf32>
    %22 = arith.addf %20, %21 : vector<2x14x128xf32>
    %c0_16 = arith.constant 0 : index
    %c0_17 = arith.constant 0 : index
    %23 = vector.load %arg6[%c0_16, %c0_17] : memref<14x128xf32, #tpu.memory_space<vmem>>, vector<14x128xf32>
    %24 = vector.shape_cast %23 : vector<14x128xf32> to vector<1x14x128xf32>
    %25 = vector.broadcast %24 : vector<1x14x128xf32> to vector<2x14x128xf32>
    %26 = arith.addf %22, %25 : vector<2x14x128xf32>
    %cst_18 = arith.constant dense<0xFF800000> : vector<2x128xf32>
    %27 = vector.multi_reduction <maximumf>, %26, %cst_18 [1] : vector<2x14x128xf32> to vector<2x128xf32>
    %c0_19 = arith.constant 0 : index
    %c0_20 = arith.constant 0 : index
    %28 = vector.load %arg3[%c0_19, %c0_20] : memref<1x128xf32, #tpu.memory_space<vmem>>, vector<1x128xf32>
    %29 = vector.broadcast %28 : vector<1x128xf32> to vector<2x128xf32>
    %30 = arith.addf %27, %29 : vector<2x128xf32>
    %31 = arith.truncf %30 : vector<2x128xf32> to vector<2x128xbf16>
    %c0_21 = arith.constant 0 : index
    %c0_22 = arith.constant 0 : index
    %32 = vector.load %arg4[%c0_21, %c0_22] : memref<128x128xbf16, #tpu.memory_space<vmem>>, vector<128x128xbf16>
    %cst_23 = arith.constant dense<0.000000e+00> : vector<2x128xf32>
    %33 = tpu.matmul %31, %32, %cst_23 {dimension_numbers = #tpu.dot_dimension_numbers<[1], [0], [0], [1], [0, 0, 1, 1], [], []>} : vector<2x128xbf16>, vector<128x128xbf16>, vector<2x128xf32> -> vector<2x128xf32>
    %c0_24 = arith.constant 0 : index
    %c0_25 = arith.constant 0 : index
    %34 = vector.load %arg5[%c0_24, %c0_25] : memref<1x128xf32, #tpu.memory_space<vmem>>, vector<1x128xf32>
    %35 = vector.broadcast %34 : vector<1x128xf32> to vector<2x128xf32>
    %36 = arith.addf %33, %35 : vector<2x128xf32>
    %c0_26 = arith.constant 0 : index
    %c0_27 = arith.constant 0 : index
    %37 = vector.load %arg7[%c0_26, %c0_27] : memref<2x128xf32, #tpu.memory_space<vmem>>, vector<2x128xf32>
    tpu.vector_store %arg7[%c0_26, %c0_27], %36 {strides = array<i32>} : memref<2x128xf32, #tpu.memory_space<vmem>>, vector<2x128xf32>,
    return
  }
  func.func @transform_0(%arg0: i32) -> (i32, i32, i32) {
    %c0_i32 = arith.constant 0 : i32
    %c0_i32_0 = arith.constant 0 : i32
    %c0_i32_1 = arith.constant 0 : i32
    return %arg0, %c0_i32, %c0_i32_0 : i32, i32, i32
  }
  func.func @transform_1(%arg0: i32) -> (i32, i32) {
    %c0_i32 = arith.constant 0 : i32
    %c0_i32_0 = arith.constant 0 : i32
    %c0_i32_1 = arith.constant 0 : i32
    return %c0_i32, %c0_i32_0 : i32, i32
  }
  func.func @transform_2(%arg0: i32) -> (i32, i32) {
    %c0_i32 = arith.constant 0 : i32
    %c0_i32_0 = arith.constant 0 : i32
    %c0_i32_1 = arith.constant 0 : i32
    return %c0_i32, %c0_i32_0 : i32, i32
  }
  func.func @transform_3(%arg0: i32) -> (i32, i32) {
    %c0_i32 = arith.constant 0 : i32
    %c0_i32_0 = arith.constant 0 : i32
    %c0_i32_1 = arith.constant 0 : i32
    return %c0_i32, %c0_i32_0 : i32, i32
  }
  func.func @transform_4(%arg0: i32) -> (i32, i32) {
    %c0_i32 = arith.constant 0 : i32
    %c0_i32_0 = arith.constant 0 : i32
    %c0_i32_1 = arith.constant 0 : i32
    return %c0_i32, %c0_i32_0 : i32, i32
  }
  func.func @transform_5(%arg0: i32) -> (i32, i32) {
    %c0_i32 = arith.constant 0 : i32
    %c0_i32_0 = arith.constant 0 : i32
    %c0_i32_1 = arith.constant 0 : i32
    return %c0_i32, %c0_i32_0 : i32, i32
  }
  func.func @transform_6(%arg0: i32) -> (i32, i32) {
    %c0_i32 = arith.constant 0 : i32
    %c0_i32_0 = arith.constant 0 : i32
    return %arg0, %c0_i32 : i32, i32
  }
}

module attributes {stable_mosaic.version = 11 : i64} {
  func.func @_textcnn_kernel(%arg0: i32, %arg1: memref<2x16x32xf32, #tpu.memory_space<vmem>>, %arg2: memref<128x768xbf16, #tpu.memory_space<vmem>>, %arg3: memref<1x128xf32, #tpu.memory_space<vmem>>, %arg4: memref<128x128xbf16, #tpu.memory_space<vmem>>, %arg5: memref<1x128xf32, #tpu.memory_space<vmem>>, %arg6: memref<14x128xf32, #tpu.memory_space<vmem>>, %arg7: memref<2x128xf32, #tpu.memory_space<vmem>>, %arg8: memref<2x24x128xbf16, #tpu.memory_space<vmem>>) attributes {dimension_semantics = [#tpu.dimension_semantics<parallel>], iteration_bounds = array<i64: 1>, scalar_prefetch = 0 : i64, scratch_operands = 1 : i64, tpu.core_type = #tpu.core_type<tc>, window_params = [{transform_indices = @transform_0, window_bounds = array<i64: 2, 16, 32>}, {pipeline_mode = #tpu.pipeline_mode<synchronous>, transform_indices = @transform_1, window_bounds = array<i64: 128, 768>}, {pipeline_mode = #tpu.pipeline_mode<synchronous>, transform_indices = @transform_2, window_bounds = array<i64: 1, 128>}, {pipeline_mode = #tpu.pipeline_mode<synchronous>, transform_indices = @transform_3, window_bounds = array<i64: 128, 128>}, {pipeline_mode = #tpu.pipeline_mode<synchronous>, transform_indices = @transform_4, window_bounds = array<i64: 1, 128>}, {pipeline_mode = #tpu.pipeline_mode<synchronous>, transform_indices = @transform_5, window_bounds = array<i64: 14, 128>}, {transform_indices = @transform_6, window_bounds = array<i64: 2, 128>}]} {
    %cst = arith.constant 0.000000e+00 : bf16
    %0 = vector.broadcast %cst : bf16 to vector<2x8x128xbf16>
    %c0 = arith.constant 0 : index
    %c16 = arith.constant 16 : index
    %c0_0 = arith.constant 0 : index
    %1 = vector.load %arg8[%c0, %c16, %c0_0] : memref<2x24x128xbf16, #tpu.memory_space<vmem>>, vector<2x8x128xbf16>
    tpu.vector_store %arg8[%c0, %c16, %c0_0], %0 {strides = array<i32>} : memref<2x24x128xbf16, #tpu.memory_space<vmem>>, vector<2x8x128xbf16>,
    %cst_1 = arith.constant 0.000000e+00 : bf16
    %2 = vector.broadcast %cst_1 : bf16 to vector<2x16x96xbf16>
    %c0_2 = arith.constant 0 : index
    %c0_3 = arith.constant 0 : index
    %c32 = arith.constant 32 : index
    %3 = vector.load %arg8[%c0_2, %c0_3, %c32] : memref<2x24x128xbf16, #tpu.memory_space<vmem>>, vector<2x16x96xbf16>
    tpu.vector_store %arg8[%c0_2, %c0_3, %c32], %2 {strides = array<i32>} : memref<2x24x128xbf16, #tpu.memory_space<vmem>>, vector<2x16x96xbf16>,
    %c0_4 = arith.constant 0 : index
    %c0_5 = arith.constant 0 : index
    %c0_6 = arith.constant 0 : index
    %4 = vector.load %arg1[%c0_4, %c0_5, %c0_6] : memref<2x16x32xf32, #tpu.memory_space<vmem>>, vector<2x16x32xf32>
    %5 = arith.truncf %4 : vector<2x16x32xf32> to vector<2x16x32xbf16>
    %c0_7 = arith.constant 0 : index
    %c0_8 = arith.constant 0 : index
    %c0_9 = arith.constant 0 : index
    %6 = vector.load %arg8[%c0_7, %c0_8, %c0_9] : memref<2x24x128xbf16, #tpu.memory_space<vmem>>, vector<2x16x32xbf16>
    tpu.vector_store %arg8[%c0_7, %c0_8, %c0_9], %5 {strides = array<i32>} : memref<2x24x128xbf16, #tpu.memory_space<vmem>>, vector<2x16x32xbf16>,
    %c0_10 = arith.constant 0 : index
    %c0_11 = arith.constant 0 : index
    %c0_12 = arith.constant 0 : index
    %7 = vector.load %arg8[%c0_10, %c0_11, %c0_12] : memref<2x24x128xbf16, #tpu.memory_space<vmem>>, vector<2x24x128xbf16>
    %8 = vector.shape_cast %7 : vector<2x24x128xbf16> to vector<48x128xbf16>
    %c0_13 = arith.constant 0 : index
    %c0_14 = arith.constant 0 : index
    %9 = vector.load %arg2[%c0_13, %c0_14] : memref<128x768xbf16, #tpu.memory_space<vmem>>, vector<128x768xbf16>
    %cst_15 = arith.constant dense<0.000000e+00> : vector<48x768xf32>
    %10 = tpu.matmul %8, %9, %cst_15 {dimension_numbers = #tpu.dot_dimension_numbers<[1], [0], [0], [1], [0, 0, 1, 1], [], []>} : vector<48x128xbf16>, vector<128x768xbf16>, vector<48x768xf32> -> vector<48x768xf32>
    %11 = vector.shape_cast %10 : vector<48x768xf32> to vector<2x24x768xf32>
    %12 = vector.extract_strided_slice %11 {offsets = [0, 0, 0], sizes = [2, 14, 128], strides = [1, 1, 1]} : vector<2x24x768xf32> to vector<2x14x128xf32>
    %13 = vector.extract_strided_slice %11 {offsets = [0, 1, 128], sizes = [2, 14, 128], strides = [1, 1, 1]} : vector<2x24x768xf32> to vector<2x14x128xf32>
    %14 = arith.addf %12, %13 : vector<2x14x128xf32>
    %15 = vector.extract_strided_slice %11 {offsets = [0, 2, 256], sizes = [2, 14, 128], strides = [1, 1, 1]} : vector<2x24x768xf32> to vector<2x14x128xf32>
    %16 = arith.addf %14, %15 : vector<2x14x128xf32>
    %17 = vector.extract_strided_slice %11 {offsets = [0, 3, 384], sizes = [2, 14, 128], strides = [1, 1, 1]} : vector<2x24x768xf32> to vector<2x14x128xf32>
    %18 = arith.addf %16, %17 : vector<2x14x128xf32>
    %19 = vector.extract_strided_slice %11 {offsets = [0, 4, 512], sizes = [2, 14, 128], strides = [1, 1, 1]} : vector<2x24x768xf32> to vector<2x14x128xf32>
    %20 = arith.addf %18, %19 : vector<2x14x128xf32>
    %21 = vector.extract_strided_slice %11 {offsets = [0, 5, 640], sizes = [2, 14, 128], strides = [1, 1, 1]} : vector<2x24x768xf32> to vector<2x14x128xf32>
    %22 = arith.addf %20, %21 : vector<2x14x128xf32>
    %c0_16 = arith.constant 0 : index
    %c0_17 = arith.constant 0 : index
    %23 = vector.load %arg6[%c0_16, %c0_17] : memref<14x128xf32, #tpu.memory_space<vmem>>, vector<14x128xf32>
    %24 = vector.shape_cast %23 : vector<14x128xf32> to vector<1x14x128xf32>
    %25 = vector.broadcast %24 : vector<1x14x128xf32> to vector<2x14x128xf32>
    %26 = arith.addf %22, %25 : vector<2x14x128xf32>
    %cst_18 = arith.constant dense<0xFF800000> : vector<2x128xf32>
    %27 = vector.multi_reduction <maximumf>, %26, %cst_18 [1] : vector<2x14x128xf32> to vector<2x128xf32>
    %c0_19 = arith.constant 0 : index
    %c0_20 = arith.constant 0 : index
    %28 = vector.load %arg3[%c0_19, %c0_20] : memref<1x128xf32, #tpu.memory_space<vmem>>, vector<1x128xf32>
    %29 = vector.broadcast %28 : vector<1x128xf32> to vector<2x128xf32>
    %30 = arith.addf %27, %29 : vector<2x128xf32>
    %31 = arith.truncf %30 : vector<2x128xf32> to vector<2x128xbf16>
    %c0_21 = arith.constant 0 : index
    %c0_22 = arith.constant 0 : index
    %32 = vector.load %arg4[%c0_21, %c0_22] : memref<128x128xbf16, #tpu.memory_space<vmem>>, vector<128x128xbf16>
    %cst_23 = arith.constant dense<0.000000e+00> : vector<2x128xf32>
    %33 = tpu.matmul %31, %32, %cst_23 {dimension_numbers = #tpu.dot_dimension_numbers<[1], [0], [0], [1], [0, 0, 1, 1], [], []>} : vector<2x128xbf16>, vector<128x128xbf16>, vector<2x128xf32> -> vector<2x128xf32>
    %c0_24 = arith.constant 0 : index
    %c0_25 = arith.constant 0 : index
    %34 = vector.load %arg5[%c0_24, %c0_25] : memref<1x128xf32, #tpu.memory_space<vmem>>, vector<1x128xf32>
    %35 = vector.broadcast %34 : vector<1x128xf32> to vector<2x128xf32>
    %36 = arith.addf %33, %35 : vector<2x128xf32>
    %c0_26 = arith.constant 0 : index
    %c0_27 = arith.constant 0 : index
    %37 = vector.load %arg7[%c0_26, %c0_27] : memref<2x128xf32, #tpu.memory_space<vmem>>, vector<2x128xf32>
    tpu.vector_store %arg7[%c0_26, %c0_27], %36 {strides = array<i32>} : memref<2x128xf32, #tpu.memory_space<vmem>>, vector<2x128xf32>,
    return
  }
  func.func @transform_0(%arg0: i32) -> (i32, i32, i32) {
    %c0_i32 = arith.constant 0 : i32
    %c0_i32_0 = arith.constant 0 : i32
    %c0_i32_1 = arith.constant 0 : i32
    return %arg0, %c0_i32, %c0_i32_0 : i32, i32, i32
  }
  func.func @transform_1(%arg0: i32) -> (i32, i32) {
    %c0_i32 = arith.constant 0 : i32
    %c0_i32_0 = arith.constant 0 : i32
    %c0_i32_1 = arith.constant 0 : i32
    return %c0_i32, %c0_i32_0 : i32, i32
  }
  func.func @transform_2(%arg0: i32) -> (i32, i32) {
    %c0_i32 = arith.constant 0 : i32
    %c0_i32_0 = arith.constant 0 : i32
    %c0_i32_1 = arith.constant 0 : i32
    return %c0_i32, %c0_i32_0 : i32, i32
  }
  func.func @transform_3(%arg0: i32) -> (i32, i32) {
    %c0_i32 = arith.constant 0 : i32
    %c0_i32_0 = arith.constant 0 : i32
    %c0_i32_1 = arith.constant 0 : i32
    return %c0_i32, %c0_i32_0 : i32, i32
  }
  func.func @transform_4(%arg0: i32) -> (i32, i32) {
    %c0_i32 = arith.constant 0 : i32
    %c0_i32_0 = arith.constant 0 : i32
    %c0_i32_1 = arith.constant 0 : i32
    return %c0_i32, %c0_i32_0 : i32, i32
  }
  func.func @transform_5(%arg0: i32) -> (i32, i32) {
    %c0_i32 = arith.constant 0 : i32
    %c0_i32_0 = arith.constant 0 : i32
    %c0_i32_1 = arith.constant 0 : i32
    return %c0_i32, %c0_i32_0 : i32, i32
  }
  func.func @transform_6(%arg0: i32) -> (i32, i32) {
    %c0_i32 = arith.constant 0 : i32
    %c0_i32_0 = arith.constant 0 : i32
    return %arg0, %c0_i32 : i32, i32
  }
}

</mosaic_0001>

<llo_original>
// kernel: tpu_custom_call.1
$region0: #{tpu_custom_call.1}
  #allocation0 [shape = 'u32[]', space=smem, size = 0x4, offset = 0x4, fixed_abs, tag = 'smem constant byte address 0x4 - core index']
  #allocation1 [shape = 'u32[144,128]{1,0:T(1,128)}', space=vmem, size = 0x12000, scoped, tag = 'internal scratch']
  #allocation2 [shape = 'bf16[2,24,128]{2,1,0:T(8,128)(2,1)}', space=vmem, size = 0x3000, scoped, tag = 'scratch operand']
  %s0 = inlined_call_operand.hbm [shape: f32[2,16,32], index: 0, kind: input, shape index: {}]
  %s1 = inlined_call_operand.hbm [shape: bf16[128,768], index: 1, kind: input, shape index: {}]
  %s2 = inlined_call_operand.vmem [shape: f32[1,128], index: 2, kind: input, shape index: {}]
  %s3 = inlined_call_operand.hbm [shape: bf16[128,128], index: 3, kind: input, shape index: {}]
  %s4 = inlined_call_operand.vmem [shape: f32[1,128], index: 4, kind: input, shape index: {}]
  %s5 = inlined_call_operand.vmem [shape: f32[14,128], index: 5, kind: input, shape index: {}]
  %s6 = inlined_call_operand.hbm [shape: f32[2,128], index: 6, kind: output, shape index: {}]
  %s7 = sld [smem:[#allocation0]]
  $region46: #{tpu_custom_call.1} parent=0
    _
  %s9 = ssub.s32 1, %s7
  %s10 = scalar_select 0, %s9, %s7
  $region1: #{tpu_custom_call.1} parent=0
    #allocation3 [shape = 'u8[16384]{0}', space=vmem, size = 0x4000, scoped, tag = 'input window, operand 0, single buffered']
    #allocation4 [shape = 's32[1]{0}', space=sflag, size = 0x4, scoped, tag = 'scoped memory for tpu_custom_call.1']
    #allocation5 [shape = 's32[1]{0}', space=sflag, size = 0x4, scoped, tag = 'scoped memory for tpu_custom_call.1']
    #allocation6 [shape = 'u8[196608]{0}', space=vmem, size = 0x30000, scoped, tag = 'input window, operand 1, single buffered']
    #allocation7 [shape = 's32[1]{0}', space=sflag, size = 0x4, scoped, tag = 'scoped memory for tpu_custom_call.1']
    #allocation8 [shape = 'u8[32768]{0}', space=vmem, size = 0x8000, scoped, tag = 'input window, operand 3, single buffered']
    #allocation9 [shape = 'u8[1024]{0}', space=vmem, size = 0x400, scoped, tag = 'output window, operand 0, single buffered']
    %11 = vsyncpa [#allocation4], 0
    %12 = vsyncpa [#allocation7], 0
    %13 = vsyncpa [#allocation5], 0
    // Predicated region
    $region2: #{tpu_custom_call.1} parent=1 // pred_check
      _
    $region3: #{tpu_custom_call.1} parent=1 // pred_check_branch
      %15 = sbr.rel (0) target = $region5
    $region4: #{tpu_custom_call.1} parent=1 // pred_region
      %s17 = ssub.s32 512, 512
      %18 = vsyncadd [#allocation4], %s17
      %s19 = sshll.u32 [#allocation3], 4
      %s20 = int_to_ptr.vmem [resolvable:$true] %s19
      %25 = dma.hbm_to_vmem [thread:$0]  %s0, 512, %s20, [#allocation4], 128, 128, 8
    $region5: #{tpu_custom_call.1} parent=1 // pred_fallthru
      _
    // Predicated region
    $region6: #{tpu_custom_call.1} parent=1 // pred_check
      _
    $region7: #{tpu_custom_call.1} parent=1 // pred_check_branch
      %27 = sbr.rel (0) target = $region9
    $region8: #{tpu_custom_call.1} parent=1 // pred_region
      %s29 = ssub.s32 6144, 6144
      %30 = vsyncadd [#allocation7], %s29
      %s31 = sshll.u32 [#allocation6], 4
      %s32 = int_to_ptr.vmem [resolvable:$true] %s31
      %37 = dma.hbm_to_vmem [thread:$0]  %s1, 6144, %s32, [#allocation7], 384, 384, 24
    $region9: #{tpu_custom_call.1} parent=1 // pred_fallthru
      _
    // Predicated region
    $region10: #{tpu_custom_call.1} parent=1 // pred_check
      _
    $region11: #{tpu_custom_call.1} parent=1 // pred_check_branch
      %39 = sbr.rel (0) target = $region13
    $region12: #{tpu_custom_call.1} parent=1 // pred_region
      _
    $region13: #{tpu_custom_call.1} parent=1 // pred_fallthru
      _
    // Predicated region
    $region14: #{tpu_custom_call.1} parent=1 // pred_check
      _
    $region15: #{tpu_custom_call.1} parent=1 // pred_check_branch
      %41 = sbr.rel (0) target = $region17
    $region16: #{tpu_custom_call.1} parent=1 // pred_region
      %s43 = ssub.s32 1024, 1024
      %44 = vsyncadd [#allocation7], %s43
      %s45 = sshll.u32 [#allocation8], 4
      %s46 = int_to_ptr.vmem [resolvable:$true] %s45
      %51 = dma.hbm_to_vmem [thread:$0]  %s3, 1024, %s46, [#allocation7], 64, 64, 4
    $region17: #{tpu_custom_call.1} parent=1 // pred_fallthru
      _
    // Predicated region
    $region18: #{tpu_custom_call.1} parent=1 // pred_check
      _
    $region19: #{tpu_custom_call.1} parent=1 // pred_check_branch
      %53 = sbr.rel (0) target = $region21
    $region20: #{tpu_custom_call.1} parent=1 // pred_region
      _
    $region21: #{tpu_custom_call.1} parent=1 // pred_fallthru
      _
    // Predicated region
    $region22: #{tpu_custom_call.1} parent=1 // pred_check
      _
    $region23: #{tpu_custom_call.1} parent=1 // pred_check_branch
      %55 = sbr.rel (0) target = $region25
    $region24: #{tpu_custom_call.1} parent=1 // pred_region
      _
    $region25: #{tpu_custom_call.1} parent=1 // pred_fallthru
      _
    // Predicated region
    $region26: #{tpu_custom_call.1} parent=1 // pred_check
      _
    $region27: #{tpu_custom_call.1} parent=1 // pred_check_branch
      %57 = sbr.rel (0) target = $region29
    $region28: #{tpu_custom_call.1} parent=1 // pred_region
      %58 = dma.done [#allocation4], 512
    $region29: #{tpu_custom_call.1} parent=1 // pred_fallthru
      _
    // Predicated region
    $region30: #{tpu_custom_call.1} parent=1 // pred_check
      _
    $region31: #{tpu_custom_call.1} parent=1 // pred_check_branch
      %60 = sbr.rel (0) target = $region33
    $region32: #{tpu_custom_call.1} parent=1 // pred_region
      %61 = dma.done [#allocation7], 6144
    $region33: #{tpu_custom_call.1} parent=1 // pred_fallthru
      _
    // Predicated region
    $region34: #{tpu_custom_call.1} parent=1 // pred_check
      _
    $region35: #{tpu_custom_call.1} parent=1 // pred_check_branch
      %63 = sbr.rel (0) target = $region37
    $region36: #{tpu_custom_call.1} parent=1 // pred_region
      %64 = dma.done [#allocation7], 1024
    $region37: #{tpu_custom_call.1} parent=1 // pred_fallthru
      _
    %66 = vst [vmem:[#allocation2 + $0x8] sm:$0xf] 0
    %67 = vst [vmem:[#allocation2 + $0x14] sm:$0xf] 0
    %vm68 = vcmask 1043712
    %69 = vst.msk [vmem:[#allocation2] sm:$0xf] %vm68, 0
    %70 = vst.msk [vmem:[#allocation2 + $0x4] sm:$0xf] %vm68, 0
    %71 = vst.msk [vmem:[#allocation2 + $0xc] sm:$0xf] %vm68, 0
    %72 = vst.msk [vmem:[#allocation2 + $0x10] sm:$0xf] %vm68, 0
    %v73 = vld [vmem:[#allocation3] sm:$0xff]
    %v74 = vld [vmem:[#allocation3 + $0x8] sm:$0xff]
    %v75 = vld [vmem:[#allocation3 + $0x10] sm:$0xff]
    %v76 = vld [vmem:[#allocation3 + $0x18] sm:$0xff]
    %v77 = vpack.c.bf16 %v74, %v73
    %v78 = vpack.c.bf16 %v76, %v75
    %v81 = vunpack.c.l.b16 %v77
    %v82 = vunpack.c.h.b16 %v77
    %v83 = vunpack.c.l.b16 %v78
    %v84 = vunpack.c.h.b16 %v78
    %v85 = vpack.c.b16 %v81, %v81
    %v86 = vpack.c.b16 %v82, %v82
    %v87 = vpack.c.b16 %v83, %v83
    %v88 = vpack.c.b16 %v84, %v84
    %vm93 = vcmask 257024
    %94 = vst.msk [vmem:[#allocation2] sm:$0xf] %vm93, %v85
    %95 = vst.msk [vmem:[#allocation2 + $0x4] sm:$0xf] %vm93, %v86
    %96 = vst.msk [vmem:[#allocation2 + $0xc] sm:$0xf] %vm93, %v87
    %97 = vst.msk [vmem:[#allocation2 + $0x10] sm:$0xf] %vm93, %v88
    %v98 = vld [vmem:[#allocation2] sm:$0xf]
    %v99 = vld [vmem:[#allocation2 + $0x4] sm:$0xf]
    %v100 = vld [vmem:[#allocation2 + $0x8] sm:$0xf]
    %v101 = vld [vmem:[#allocation2 + $0xc] sm:$0xf]
    %v102 = vld [vmem:[#allocation2 + $0x10] sm:$0xf]
    %v103 = vld [vmem:[#allocation2 + $0x14] sm:$0xf]
    %v104 = vld [vmem:[#allocation6] sm:$0xff]
    %v105 = vld [vmem:[#allocation6 + $0x8] sm:$0xff]
    %v106 = vld [vmem:[#allocation6 + $0x10] sm:$0xff]
    %v107 = vld [vmem:[#allocation6 + $0x18] sm:$0xff]
    %v108 = vld [vmem:[#allocation6 + $0x20] sm:$0xff]
    %v109 = vld [vmem:[#allocation6 + $0x28] sm:$0xff]
    %v110 = vld [vmem:[#allocation6 + $0x30] sm:$0xff]
    %v111 = vld [vmem:[#allocation6 + $0x38] sm:$0xff]
    %v112 = vld [vmem:[#allocation6 + $0x40] sm:$0xff]
    %v113 = vld [vmem:[#allocation6 + $0x48] sm:$0xff]
    %v114 = vld [vmem:[#allocation6 + $0x50] sm:$0xff]
    %v115 = vld [vmem:[#allocation6 + $0x58] sm:$0xff]
    %v116 = vld [vmem:[#allocation6 + $0x60] sm:$0xff]
    %v117 = vld [vmem:[#allocation6 + $0x68] sm:$0xff]
    %v118 = vld [vmem:[#allocation6 + $0x70] sm:$0xff]
    %v119 = vld [vmem:[#allocation6 + $0x78] sm:$0xff]
    %v120 = vld [vmem:[#allocation6 + $0x80] sm:$0xff]
    %v121 = vld [vmem:[#allocation6 + $0x88] sm:$0xff]
    %v122 = vld [vmem:[#allocation6 + $0x90] sm:$0xff]
    %v123 = vld [vmem:[#allocation6 + $0x98] sm:$0xff]
    %v124 = vld [vmem:[#allocation6 + $0xa0] sm:$0xff]
    %v125 = vld [vmem:[#allocation6 + $0xa8] sm:$0xff]
    %v126 = vld [vmem:[#allocation6 + $0xb0] sm:$0xff]
    %v127 = vld [vmem:[#allocation6 + $0xb8] sm:$0xff]
    %v128 = vld [vmem:[#allocation6 + $0xc0] sm:$0xff]
    %v129 = vld [vmem:[#allocation6 + $0xc8] sm:$0xff]
    %v130 = vld [vmem:[#allocation6 + $0xd0] sm:$0xff]
    %v131 = vld [vmem:[#allocation6 + $0xd8] sm:$0xff]
    %v132 = vld [vmem:[#allocation6 + $0xe0] sm:$0xff]
    %v133 = vld [vmem:[#allocation6 + $0xe8] sm:$0xff]
    %v134 = vld [vmem:[#allocation6 + $0xf0] sm:$0xff]
    %v135 = vld [vmem:[#allocation6 + $0xf8] sm:$0xff]
    %v136 = vld [vmem:[#allocation6 + $0x100] sm:$0xff]
    %v137 = vld [vmem:[#allocation6 + $0x108] sm:$0xff]
    %v138 = vld [vmem:[#allocation6 + $0x110] sm:$0xff]
    %v139 = vld [vmem:[#allocation6 + $0x118] sm:$0xff]
    %v140 = vld [vmem:[#allocation6 + $0x120] sm:$0xff]
    %v141 = vld [vmem:[#allocation6 + $0x128] sm:$0xff]
    %v142 = vld [vmem:[#allocation6 + $0x130] sm:$0xff]
    %v143 = vld [vmem:[#allocation6 + $0x138] sm:$0xff]
    %v144 = vld [vmem:[#allocation6 + $0x140] sm:$0xff]
    %v145 = vld [vmem:[#allocation6 + $0x148] sm:$0xff]
    %v146 = vld [vmem:[#allocation6 + $0x150] sm:$0xff]
    %v147 = vld [vmem:[#allocation6 + $0x158] sm:$0xff]
    %v148 = vld [vmem:[#allocation6 + $0x160] sm:$0xff]
    %v149 = vld [vmem:[#allocation6 + $0x168] sm:$0xff]
    %v150 = vld [vmem:[#allocation6 + $0x170] sm:$0xff]
    %v151 = vld [vmem:[#allocation6 + $0x178] sm:$0xff]
    %v158 = vunpack.c.l.b16 %v98
    %v159 = vunpack.c.l.b16 %v99
    %v160 = vunpack.c.l.b16 %v100
    %v161 = vunpack.c.l.b16 %v101
    %v162 = vunpack.c.l.b16 %v102
    %v163 = vunpack.c.l.b16 %v103
    %v164 = vpack.c.b16 %v159, %v158
    %v165 = vpack.c.b16 %v161, %v160
    %v166 = vpack.c.b16 %v163, %v162
    %v218 = vunpack.c.l.b16 %v104
    %v219 = vunpack.c.h.b16 %v104
    %v220 = vunpack.c.l.b16 %v105
    %v221 = vunpack.c.h.b16 %v105
    %v222 = vunpack.c.l.b16 %v106
    %v223 = vunpack.c.h.b16 %v106
    %v224 = vunpack.c.l.b16 %v107
    %v225 = vunpack.c.h.b16 %v107
    %v226 = vunpack.c.l.b16 %v108
    %v227 = vunpack.c.h.b16 %v108
    %v228 = vunpack.c.l.b16 %v109
    %v229 = vunpack.c.h.b16 %v109
    %v230 = vunpack.c.l.b16 %v110
    %v231 = vunpack.c.h.b16 %v110
    %v232 = vunpack.c.l.b16 %v111
    %v233 = vunpack.c.h.b16 %v111
    %v234 = vunpack.c.l.b16 %v112
    %v235 = vunpack.c.h.b16 %v112
    %v236 = vunpack.c.l.b16 %v113
    %v237 = vunpack.c.h.b16 %v113
    %v238 = vunpack.c.l.b16 %v114
    %v239 = vunpack.c.h.b16 %v114
    %v240 = vunpack.c.l.b16 %v115
    %v241 = vunpack.c.h.b16 %v115
    %v242 = vunpack.c.l.b16 %v116
    %v243 = vunpack.c.h.b16 %v116
    %v244 = vunpack.c.l.b16 %v117
    %v245 = vunpack.c.h.b16 %v117
    %v246 = vunpack.c.l.b16 %v118
    %v247 = vunpack.c.h.b16 %v118
    %v248 = vunpack.c.l.b16 %v119
    %v249 = vunpack.c.h.b16 %v119
    %v250 = vunpack.c.l.b16 %v120
    %v251 = vunpack.c.h.b16 %v120
    %v252 = vunpack.c.l.b16 %v121
    %v253 = vunpack.c.h.b16 %v121
    %v254 = vunpack.c.l.b16 %v122
    %v255 = vunpack.c.h.b16 %v122
    %v256 = vunpack.c.l.b16 %v123
    %v257 = vunpack.c.h.b16 %v123
    %v258 = vunpack.c.l.b16 %v124
    %v259 = vunpack.c.h.b16 %v124
    %v260 = vunpack.c.l.b16 %v125
    %v261 = vunpack.c.h.b16 %v125
    %v262 = vunpack.c.l.b16 %v126
    %v263 = vunpack.c.h.b16 %v126
    %v264 = vunpack.c.l.b16 %v127
    %v265 = vunpack.c.h.b16 %v127
    %v266 = vunpack.c.l.b16 %v128
    %v267 = vunpack.c.h.b16 %v128
    %v268 = vunpack.c.l.b16 %v129
    %v269 = vunpack.c.h.b16 %v129
    %v270 = vunpack.c.l.b16 %v130
    %v271 = vunpack.c.h.b16 %v130
    %v272 = vunpack.c.l.b16 %v131
    %v273 = vunpack.c.h.b16 %v131
    %v274 = vunpack.c.l.b16 %v132
    %v275 = vunpack.c.h.b16 %v132
    %v276 = vunpack.c.l.b16 %v133
    %v277 = vunpack.c.h.b16 %v133
    %v278 = vunpack.c.l.b16 %v134
    %v279 = vunpack.c.h.b16 %v134
    %v280 = vunpack.c.l.b16 %v135
    %v281 = vunpack.c.h.b16 %v135
    %v282 = vunpack.c.l.b16 %v136
    %v283 = vunpack.c.h.b16 %v136
    %v284 = vunpack.c.l.b16 %v137
    %v285 = vunpack.c.h.b16 %v137
    %v286 = vunpack.c.l.b16 %v138
    %v287 = vunpack.c.h.b16 %v138
    %v288 = vunpack.c.l.b16 %v139
    %v289 = vunpack.c.h.b16 %v139
    %v290 = vunpack.c.l.b16 %v140
    %v291 = vunpack.c.h.b16 %v140
    %v292 = vunpack.c.l.b16 %v141
    %v293 = vunpack.c.h.b16 %v141
    %v294 = vunpack.c.l.b16 %v142
    %v295 = vunpack.c.h.b16 %v142
    %v296 = vunpack.c.l.b16 %v143
    %v297 = vunpack.c.h.b16 %v143
    %v298 = vunpack.c.l.b16 %v144
    %v299 = vunpack.c.h.b16 %v144
    %v300 = vunpack.c.l.b16 %v145
    %v301 = vunpack.c.h.b16 %v145
    %v302 = vunpack.c.l.b16 %v146
    %v303 = vunpack.c.h.b16 %v146
    %v304 = vunpack.c.l.b16 %v147
    %v305 = vunpack.c.h.b16 %v147
    %v306 = vunpack.c.l.b16 %v148
    %v307 = vunpack.c.h.b16 %v148
    %v308 = vunpack.c.l.b16 %v149
    %v309 = vunpack.c.h.b16 %v149
    %v310 = vunpack.c.l.b16 %v150
    %v311 = vunpack.c.h.b16 %v150
    %v312 = vunpack.c.l.b16 %v151
    %v313 = vunpack.c.h.b16 %v151
    %v314 = vpack.c.b16 %v224, %v218
    %v315 = vpack.c.b16 %v225, %v219
    %v316 = vpack.c.b16 %v226, %v220
    %v317 = vpack.c.b16 %v227, %v221
    %v318 = vpack.c.b16 %v228, %v222
    %v319 = vpack.c.b16 %v229, %v223
    %v320 = vpack.c.b16 %v236, %v230
    %v321 = vpack.c.b16 %v237, %v231
    %v322 = vpack.c.b16 %v238, %v232
    %v323 = vpack.c.b16 %v239, %v233
    %v324 = vpack.c.b16 %v240, %v234
    %v325 = vpack.c.b16 %v241, %v235
    %v326 = vpack.c.b16 %v248, %v242
    %v327 = vpack.c.b16 %v249, %v243
    %v328 = vpack.c.b16 %v250, %v244
    %v329 = vpack.c.b16 %v251, %v245
    %v330 = vpack.c.b16 %v252, %v246
    %v331 = vpack.c.b16 %v253, %v247
    %v332 = vpack.c.b16 %v260, %v254
    %v333 = vpack.c.b16 %v261, %v255
    %v334 = vpack.c.b16 %v262, %v256
    %v335 = vpack.c.b16 %v263, %v257
    %v336 = vpack.c.b16 %v264, %v258
    %v337 = vpack.c.b16 %v265, %v259
    %v338 = vpack.c.b16 %v272, %v266
    %v339 = vpack.c.b16 %v273, %v267
    %v340 = vpack.c.b16 %v274, %v268
    %v341 = vpack.c.b16 %v275, %v269
    %v342 = vpack.c.b16 %v276, %v270
    %v343 = vpack.c.b16 %v277, %v271
    %v344 = vpack.c.b16 %v284, %v278
    %v345 = vpack.c.b16 %v285, %v279
    %v346 = vpack.c.b16 %v286, %v280
    %v347 = vpack.c.b16 %v287, %v281
    %v348 = vpack.c.b16 %v288, %v282
    %v349 = vpack.c.b16 %v289, %v283
    %v350 = vpack.c.b16 %v296, %v290
    %v351 = vpack.c.b16 %v297, %v291
    %v352 = vpack.c.b16 %v298, %v292
    %v353 = vpack.c.b16 %v299, %v293
    %v354 = vpack.c.b16 %v300, %v294
    %v355 = vpack.c.b16 %v301, %v295
    %v356 = vpack.c.b16 %v308, %v302
    %v357 = vpack.c.b16 %v309, %v303
    %v358 = vpack.c.b16 %v310, %v304
    %v359 = vpack.c.b16 %v311, %v305
    %v360 = vpack.c.b16 %v312, %v306
    %v361 = vpack.c.b16 %v313, %v307
    %410 = vmatprep.subr.bf16.mxu0 %v315
    %411 = vmatpush1.bf16.msra.mxu0 %v314
    %412 = vmatprep.subr.bf16.mxu0 %v321
    %413 = vmatpush1.bf16.msra.mxu0 %v320
    %414 = vmatprep.subr.bf16.mxu0 %v327
    %415 = vmatpush1.bf16.msra.mxu0 %v326
    %416 = vmatprep.subr.bf16.mxu0 %v333
    %417 = vmatpush1.bf16.msra.mxu0 %v332
    %418 = vmatprep.subr.bf16.mxu0 %v339
    %419 = vmatpush1.bf16.msra.mxu0 %v338
    %420 = vmatprep.subr.bf16.mxu0 %v345
    %421 = vmatpush1.bf16.msra.mxu0 %v344
    %422 = vmatprep.subr.bf16.mxu0 %v351
    %423 = vmatpush1.bf16.msra.mxu0 %v350
    %424 = vmatprep.subr.bf16.mxu0 %v357
    %425 = vmatpush1.bf16.msra.mxu0 %v356
    %426 = vmatprep.subr.bf16.mxu0 0
    %427 = vmatpush1.bf16.msra.mxu0 0
    %428 = vmatprep.subr.bf16.mxu0 0
    %429 = vmatpush1.bf16.msra.mxu0 0
    %430 = vmatprep.subr.bf16.mxu0 0
    %431 = vmatpush1.bf16.msra.mxu0 0
    %432 = vmatprep.subr.bf16.mxu0 0
    %433 = vmatpush1.bf16.msra.mxu0 0
    %434 = vmatprep.subr.bf16.mxu0 0
    %435 = vmatpush1.bf16.msra.mxu0 0
    %436 = vmatprep.subr.bf16.mxu0 0
    %437 = vmatpush1.bf16.msra.mxu0 0
    %438 = vmatprep.subr.bf16.mxu0 0
    %439 = vmatpush1.bf16.msra.mxu0 0
    %440 = vmatprep.subr.bf16.mxu0 0
    %441 = vmatpush1.bf16.msra.mxu0 0
    %442 = vmatprep.mubr.bf16.mxu0 0
    %443 = vmatmul.mubr.bf16.gmra.mrb[0].mxu0 %v164
    %v444 = vpop.f32.mrb[0].mxu0
    %v445 = vadd.f32 0.0, %v444
    %v446 = vpop.f32.mrb[0].mxu0
    %v447 = vadd.f32 0.0, %v446
    %v448 = vpop.f32.mrb[0].mxu0
    %v449 = vadd.f32 0.0, %v448
    %v450 = vpop.f32.mrb[0].mxu0
    %v451 = vadd.f32 0.0, %v450
    %452 = vmatprep.mubr.bf16.mxu0 0
    %453 = vmatmul.mubr.bf16.gmra.mrb[0].mxu0 %v165
    %v454 = vpop.f32.mrb[0].mxu0
    %v455 = vpop.f32.mrb[0].mxu0
    %v456 = vpop.f32.mrb[0].mxu0
    %v457 = vadd.f32 0.0, %v456
    %v458 = vpop.f32.mrb[0].mxu0
    %v459 = vadd.f32 0.0, %v458
    %460 = vmatprep.mubr.bf16.mxu0 0
    %461 = vmatmul.mubr.bf16.gmra.mrb[0].mxu0 %v166
    %v462 = vpop.f32.mrb[0].mxu0
    %v463 = vadd.f32 0.0, %v462
    %v464 = vpop.f32.mrb[0].mxu0
    %v465 = vadd.f32 0.0, %v464
    %v466 = vpop.f32.mrb[0].mxu0
    %v467 = vpop.f32.mrb[0].mxu0
    %468 = vdwg.mxu0
    %469 = vmatprep.subr.bf16.mxu0 %v317
    %470 = vmatpush1.bf16.msra.mxu0 %v316
    %471 = vmatprep.subr.bf16.mxu0 %v323
    %472 = vmatpush1.bf16.msra.mxu0 %v322
    %473 = vmatprep.subr.bf16.mxu0 %v329
    %474 = vmatpush1.bf16.msra.mxu0 %v328
    %475 = vmatprep.subr.bf16.mxu0 %v335
    %476 = vmatpush1.bf16.msra.mxu0 %v334
    %477 = vmatprep.subr.bf16.mxu0 %v341
    %478 = vmatpush1.bf16.msra.mxu0 %v340
    %479 = vmatprep.subr.bf16.mxu0 %v347
    %480 = vmatpush1.bf16.msra.mxu0 %v346
    %481 = vmatprep.subr.bf16.mxu0 %v353
    %482 = vmatpush1.bf16.msra.mxu0 %v352
    %483 = vmatprep.subr.bf16.mxu0 %v359
    %484 = vmatpush1.bf16.msra.mxu0 %v358
    %485 = vmatprep.subr.bf16.mxu0 0
    %486 = vmatpush1.bf16.msra.mxu0 0
    %487 = vmatprep.subr.bf16.mxu0 0
    %488 = vmatpush1.bf16.msra.mxu0 0
    %489 = vmatprep.subr.bf16.mxu0 0
    %490 = vmatpush1.bf16.msra.mxu0 0
    %491 = vmatprep.subr.bf16.mxu0 0
    %492 = vmatpush1.bf16.msra.mxu0 0
    %493 = vmatprep.subr.bf16.mxu0 0
    %494 = vmatpush1.bf16.msra.mxu0 0
    %495 = vmatprep.subr.bf16.mxu0 0
    %496 = vmatpush1.bf16.msra.mxu0 0
    %497 = vmatprep.subr.bf16.mxu0 0
    %498 = vmatpush1.bf16.msra.mxu0 0
    %499 = vmatprep.subr.bf16.mxu0 0
    %500 = vmatpush1.bf16.msra.mxu0 0
    %501 = vmatprep.mubr.bf16.mxu0 0
    %502 = vmatmul.mubr.bf16.gmra.mrb[0].mxu0 %v164
    %v503 = vpop.f32.mrb[0].mxu0
    %v504 = vadd.f32 0.0, %v503
    %v505 = vpop.f32.mrb[0].mxu0
    %v506 = vadd.f32 0.0, %v505
    %v507 = vpop.f32.mrb[0].mxu0
    %v508 = vadd.f32 0.0, %v507
    %v509 = vpop.f32.mrb[0].mxu0
    %v510 = vadd.f32 0.0, %v509
    %511 = vmatprep.mubr.bf16.mxu0 0
    %512 = vmatmul.mubr.bf16.gmra.mrb[0].mxu0 %v165
    %v513 = vpop.f32.mrb[0].mxu0
    %v514 = vpop.f32.mrb[0].mxu0
    %v515 = vadd.f32 0.0, %v514
    %v516 = vpop.f32.mrb[0].mxu0
    %v517 = vadd.f32 0.0, %v516
    %v518 = vpop.f32.mrb[0].mxu0
    %v519 = vadd.f32 0.0, %v518
    %520 = vmatprep.mubr.bf16.mxu0 0
    %521 = vmatmul.mubr.bf16.gmra.mrb[0].mxu0 %v166
    %v522 = vpop.f32.mrb[0].mxu0
    %v523 = vadd.f32 0.0, %v522
    %v524 = vpop.f32.mrb[0].mxu0
    %v525 = vadd.f32 0.0, %v524
    %v526 = vpop.f32.mrb[0].mxu0
    %v527 = vpop.f32.mrb[0].mxu0
    %v528 = vadd.f32 0.0, %v527
    %529 = vdwg.mxu0
    %530 = vmatprep.subr.bf16.mxu0 %v319
    %531 = vmatpush1.bf16.msra.mxu0 %v318
    %532 = vmatprep.subr.bf16.mxu0 %v325
    %533 = vmatpush1.bf16.msra.mxu0 %v324
    %534 = vmatprep.subr.bf16.mxu0 %v331
    %535 = vmatpush1.bf16.msra.mxu0 %v330
    %536 = vmatprep.subr.bf16.mxu0 %v337
    %537 = vmatpush1.bf16.msra.mxu0 %v336
    %538 = vmatprep.subr.bf16.mxu0 %v343
    %539 = vmatpush1.bf16.msra.mxu0 %v342
    %540 = vmatprep.subr.bf16.mxu0 %v349
    %541 = vmatpush1.bf16.msra.mxu0 %v348
    %542 = vmatprep.subr.bf16.mxu0 %v355
    %543 = vmatpush1.bf16.msra.mxu0 %v354
    %544 = vmatprep.subr.bf16.mxu0 %v361
    %545 = vmatpush1.bf16.msra.mxu0 %v360
    %546 = vmatprep.subr.bf16.mxu0 0
    %547 = vmatpush1.bf16.msra.mxu0 0
    %548 = vmatprep.subr.bf16.mxu0 0
    %549 = vmatpush1.bf16.msra.mxu0 0
    %550 = vmatprep.subr.bf16.mxu0 0
    %551 = vmatpush1.bf16.msra.mxu0 0
    %552 = vmatprep.subr.bf16.mxu0 0
    %553 = vmatpush1.bf16.msra.mxu0 0
    %554 = vmatprep.subr.bf16.mxu0 0
    %555 = vmatpush1.bf16.msra.mxu0 0
    %556 = vmatprep.subr.bf16.mxu0 0
    %557 = vmatpush1.bf16.msra.mxu0 0
    %558 = vmatprep.subr.bf16.mxu0 0
    %559 = vmatpush1.bf16.msra.mxu0 0
    %560 = vmatprep.subr.bf16.mxu0 0
    %561 = vmatpush1.bf16.msra.mxu0 0
    %562 = vmatprep.mubr.bf16.mxu0 0
    %563 = vmatmul.mubr.bf16.gmra.mrb[0].mxu0 %v164
    %v564 = vpop.f32.mrb[0].mxu0
    %v565 = vadd.f32 0.0, %v564
    %v566 = vpop.f32.mrb[0].mxu0
    %v567 = vadd.f32 0.0, %v566
    %v568 = vpop.f32.mrb[0].mxu0
    %v569 = vadd.f32 0.0, %v568
    %v570 = vpop.f32.mrb[0].mxu0
    %v571 = vadd.f32 0.0, %v570
    %572 = vmatprep.mubr.bf16.mxu0 0
    %573 = vmatmul.mubr.bf16.gmra.mrb[0].mxu0 %v165
    %v574 = vpop.f32.mrb[0].mxu0
    %v575 = vadd.f32 0.0, %v574
    %v576 = vpop.f32.mrb[0].mxu0
    %v577 = vadd.f32 0.0, %v576
    %v578 = vpop.f32.mrb[0].mxu0
    %v579 = vadd.f32 0.0, %v578
    %v580 = vpop.f32.mrb[0].mxu0
    %v581 = vadd.f32 0.0, %v580
    %582 = vmatprep.mubr.bf16.mxu0 0
    %583 = vmatmul.mubr.bf16.gmra.mrb[0].mxu0 %v166
    %v584 = vpop.f32.mrb[0].mxu0
    %v585 = vadd.f32 0.0, %v584
    %v586 = vpop.f32.mrb[0].mxu0
    %v587 = vadd.f32 0.0, %v586
    %v588 = vpop.f32.mrb[0].mxu0
    %v589 = vadd.f32 0.0, %v588
    %v590 = vpop.f32.mrb[0].mxu0
    %v591 = vadd.f32 0.0, %v590
    %592 = vdwg.mxu0
    %vm597 = vcmask 1046528
    %v598 = vrot.slane %v447, 1
    %v599 = vrot.slane %v451, 1
    %v600 = vsel %vm597, %v598, %v599
    %v601 = vrot.slane %v459, 1
    %v602 = vrot.slane %v465, 1
    %v603 = vsel %vm597, %v601, %v602
    %v608 = vadd.f32 %v445, %v600
    %v609 = vadd.f32 %v449, %v599
    %v610 = vadd.f32 %v457, %v603
    %v611 = vadd.f32 %v463, %v602
    %vm616 = vcmask 1045504
    %v617 = vrot.slane %v504, 2
    %v618 = vrot.slane %v508, 2
    %v619 = vsel %vm616, %v617, %v618
    %v620 = vrot.slane %v517, 2
    %v621 = vrot.slane %v523, 2
    %v622 = vsel %vm616, %v620, %v621
    %v627 = vadd.f32 %v608, %v619
    %v628 = vadd.f32 %v609, %v618
    %v629 = vadd.f32 %v610, %v622
    %v630 = vadd.f32 %v611, %v621
    %vm637 = vcmask 1044480
    %v638 = vrot.slane %v506, 3
    %v639 = vrot.slane %v510, 3
    %v640 = vsel %vm637, %v638, %v639
    %v641 = vrot.slane %v515, 3
    %v642 = vsel %vm637, %v639, %v641
    %v643 = vrot.slane %v519, 3
    %v644 = vrot.slane %v525, 3
    %v645 = vsel %vm637, %v643, %v644
    %v646 = vrot.slane %v528, 3
    %v647 = vsel %vm637, %v644, %v646
    %v652 = vadd.f32 %v627, %v640
    %v653 = vadd.f32 %v628, %v642
    %v654 = vadd.f32 %v629, %v645
    %v655 = vadd.f32 %v630, %v647
    %vm662 = vcmask 1043456
    %v663 = vrot.slane %v565, 4
    %v664 = vrot.slane %v569, 4
    %v665 = vsel %vm662, %v663, %v664
    %v666 = vrot.slane %v575, 4
    %v667 = vsel %vm662, %v664, %v666
    %v668 = vrot.slane %v579, 4
    %v669 = vrot.slane %v585, 4
    %v670 = vsel %vm662, %v668, %v669
    %v671 = vrot.slane %v589, 4
    %v672 = vsel %vm662, %v669, %v671
    %v677 = vadd.f32 %v652, %v665
    %v678 = vadd.f32 %v653, %v667
    %v679 = vadd.f32 %v654, %v670
    %v680 = vadd.f32 %v655, %v672
    %vm687 = vcmask 1042432
    %v688 = vrot.slane %v567, 5
    %v689 = vrot.slane %v571, 5
    %v690 = vsel %vm687, %v688, %v689
    %v691 = vrot.slane %v577, 5
    %v692 = vsel %vm687, %v689, %v691
    %v693 = vrot.slane %v581, 5
    %v694 = vrot.slane %v587, 5
    %v695 = vsel %vm687, %v693, %v694
    %v696 = vrot.slane %v591, 5
    %v697 = vsel %vm687, %v694, %v696
    %v702 = vadd.f32 %v677, %v690
    %v703 = vadd.f32 %v678, %v692
    %v704 = vadd.f32 %v679, %v695
    %v705 = vadd.f32 %v680, %v697
    %v706 = vld [vmem:[%s5] sm:$0xff]
    %v707 = vld [vmem:[%s5 + $0x8] sm:$0x3f]
    %v708 = vadd.f32 %v702, %v706
    %v709 = vadd.f32 %v703, %v707
    %v710 = vadd.f32 %v704, %v706
    %v711 = vadd.f32 %v705, %v707
    %v712 = vsel %vm616, %v709, -inf
    %v713 = vmax.f32 %v708, %v712
    %v714 = vrot.slane %v713, 4
    %v715 = vmax.f32 %v713, %v714
    %v716 = vrot.slane %v715, 2
    %v717 = vmax.f32 %v715, %v716
    %v718 = vrot.slane %v717, 1
    %v719 = vmax.f32 %v717, %v718
    %v720 = vsel %vm616, %v711, -inf
    %v721 = vmax.f32 %v710, %v720
    %v722 = vrot.slane %v721, 4
    %v723 = vmax.f32 %v721, %v722
    %v724 = vrot.slane %v723, 2
    %v725 = vmax.f32 %v723, %v724
    %v726 = vrot.slane %v725, 1
    %v727 = vmax.f32 %v725, %v726
    %v728 = vld [vmem:[%s2] sm:$0x1]
    %v730 = vlaneseq
    %v731 = vshrl.u32 %v730, 7
    %v732 = vsub.s32 0, %v731
    %v733 = vrot.slane %v728, %v732
    %v735 = vadd.f32 %v719, %v733
    %v736 = vadd.f32 %v727, %v733
    %v737 = vpack.c.bf16 %v735, %v735
    %v738 = vpack.c.bf16 %v736, %v736
    %v739 = vld [vmem:[#allocation8] sm:$0xf]
    %v740 = vld [vmem:[#allocation8 + $0x4] sm:$0xf]
    %v741 = vld [vmem:[#allocation8 + $0x8] sm:$0xf]
    %v742 = vld [vmem:[#allocation8 + $0xc] sm:$0xf]
    %v743 = vld [vmem:[#allocation8 + $0x10] sm:$0xf]
    %v744 = vld [vmem:[#allocation8 + $0x14] sm:$0xf]
    %v745 = vld [vmem:[#allocation8 + $0x18] sm:$0xf]
    %v746 = vld [vmem:[#allocation8 + $0x1c] sm:$0xf]
    %v747 = vld [vmem:[#allocation8 + $0x20] sm:$0xf]
    %v748 = vld [vmem:[#allocation8 + $0x24] sm:$0xf]
    %v749 = vld [vmem:[#allocation8 + $0x28] sm:$0xf]
    %v750 = vld [vmem:[#allocation8 + $0x2c] sm:$0xf]
    %v751 = vld [vmem:[#allocation8 + $0x30] sm:$0xf]
    %v752 = vld [vmem:[#allocation8 + $0x34] sm:$0xf]
    %v753 = vld [vmem:[#allocation8 + $0x38] sm:$0xf]
    %v754 = vld [vmem:[#allocation8 + $0x3c] sm:$0xf]
    %v755 = vld [vmem:[%s4] sm:$0x1]
    %v757 = vlaneseq
    %v758 = vshrl.u32 %v757, 7
    %v759 = vsub.s32 0, %v758
    %v760 = vrot.slane %v755, %v759
    %v764 = vunpack.c.l.b16 %v737
    %v765 = vunpack.c.l.b16 %v738
    %v766 = vrot.slane %v765, 7
    %vm767 = vcmask 1041409
    %v768 = vsel %vm767, %v766, %v764
    %v769 = vpack.c.b16 %v768, %v768
    %v787 = vunpack.c.l.b16 %v739
    %v788 = vunpack.c.l.b16 %v740
    %v789 = vunpack.c.l.b16 %v741
    %v790 = vunpack.c.l.b16 %v742
    %v791 = vunpack.c.l.b16 %v743
    %v792 = vunpack.c.l.b16 %v744
    %v793 = vunpack.c.l.b16 %v745
    %v794 = vunpack.c.l.b16 %v746
    %v795 = vunpack.c.l.b16 %v747
    %v796 = vunpack.c.l.b16 %v748
    %v797 = vunpack.c.l.b16 %v749
    %v798 = vunpack.c.l.b16 %v750
    %v799 = vunpack.c.l.b16 %v751
    %v800 = vunpack.c.l.b16 %v752
    %v801 = vunpack.c.l.b16 %v753
    %v802 = vunpack.c.l.b16 %v754
    %v803 = vpack.c.b16 %v788, %v787
    %v804 = vpack.c.b16 %v790, %v789
    %v805 = vpack.c.b16 %v792, %v791
    %v806 = vpack.c.b16 %v794, %v793
    %v807 = vpack.c.b16 %v796, %v795
    %v808 = vpack.c.b16 %v798, %v797
    %v809 = vpack.c.b16 %v800, %v799
    %v810 = vpack.c.b16 %v802, %v801
    %819 = vmatprep.subr.bf16.mxu0 0
    %820 = vmatpush1.bf16.msra.mxu0 %v803
    %821 = vmatprep.subr.bf16.mxu0 0
    %822 = vmatpush1.bf16.msra.mxu0 %v804
    %823 = vmatprep.subr.bf16.mxu0 0
    %824 = vmatpush1.bf16.msra.mxu0 %v805
    %825 = vmatprep.subr.bf16.mxu0 0
    %826 = vmatpush1.bf16.msra.mxu0 %v806
    %827 = vmatprep.subr.bf16.mxu0 0
    %828 = vmatpush1.bf16.msra.mxu0 %v807
    %829 = vmatprep.subr.bf16.mxu0 0
    %830 = vmatpush1.bf16.msra.mxu0 %v808
    %831 = vmatprep.subr.bf16.mxu0 0
    %832 = vmatpush1.bf16.msra.mxu0 %v809
    %833 = vmatprep.subr.bf16.mxu0 0
    %834 = vmatpush1.bf16.msra.mxu0 %v810
    %835 = vmatprep.subr.bf16.mxu0 0
    %836 = vmatpush1.bf16.msra.mxu0 0
    %837 = vmatprep.subr.bf16.mxu0 0
    %838 = vmatpush1.bf16.msra.mxu0 0
    %839 = vmatprep.subr.bf16.mxu0 0
    %840 = vmatpush1.bf16.msra.mxu0 0
    %841 = vmatprep.subr.bf16.mxu0 0
    %842 = vmatpush1.bf16.msra.mxu0 0
    %843 = vmatprep.subr.bf16.mxu0 0
    %844 = vmatpush1.bf16.msra.mxu0 0
    %845 = vmatprep.subr.bf16.mxu0 0
    %846 = vmatpush1.bf16.msra.mxu0 0
    %847 = vmatprep.subr.bf16.mxu0 0
    %848 = vmatpush1.bf16.msra.mxu0 0
    %849 = vmatprep.subr.bf16.mxu0 0
    %850 = vmatpush1.bf16.msra.mxu0 0
    %851 = vmatprep.mubr.bf16.mxu0 0
    %852 = vmatmul.mubr.bf16.gmra.mrb[0].mxu0 %v769
    %v853 = vpop.f32.mrb[0].mxu0
    %v854 = vadd.f32 %v760, %v853
    %v855 = vpop.f32.mrb[0].mxu0
    %v856 = vpop.f32.mrb[0].mxu0
    %v857 = vpop.f32.mrb[0].mxu0
    %858 = vdwg.mxu0
    %859 = vst [vmem:[#allocation9] sm:$0x3] %v854
    // Predicated region
    $region38: #{tpu_custom_call.1} parent=1 // pred_check
      _
    $region39: #{tpu_custom_call.1} parent=1 // pred_check_branch
      %861 = sbr.rel (0) target = $region41
    $region40: #{tpu_custom_call.1} parent=1 // pred_region
      %s863 = ssub.s32 32, 32
      %864 = vsyncadd [#allocation5], %s863
      %s866 = sshll.u32 [#allocation9], 4
      %s867 = int_to_ptr.vmem [resolvable:$true] %s866
      %869 = dma.vmem_to_hbm [thread:$0]  %s867, 32, %s6, [#allocation5]
    $region41: #{tpu_custom_call.1} parent=1 // pred_fallthru
      _
    // Predicated region
    $region42: #{tpu_custom_call.1} parent=1 // pred_check
      _
    $region43: #{tpu_custom_call.1} parent=1 // pred_check_branch
      %871 = sbr.rel (0) target = $region45
    $region44: #{tpu_custom_call.1} parent=1 // pred_region
      %872 = dma.done [#allocation5], 32
    $region45: #{tpu_custom_call.1} parent=1 // pred_fallthru
      _
    %873 = vsyncpa [#allocation4], 1
    %874 = vsyncpa [#allocation7], 1
    %875 = vsyncpa [#allocation5], 1

// kernel: tpu_custom_call.1
$region0: #{tpu_custom_call.1}
  #allocation0 [shape = 'u32[]', space=smem, size = 0x4, offset = 0x4, fixed_abs, tag = 'smem constant byte address 0x4 - core index']
  #allocation1 [shape = 'u32[144,128]{1,0:T(1,128)}', space=vmem, size = 0x12000, scoped, tag = 'internal scratch']
  #allocation2 [shape = 'bf16[2,24,128]{2,1,0:T(8,128)(2,1)}', space=vmem, size = 0x3000, scoped, tag = 'scratch operand']
  %s0 = inlined_call_operand.hbm [shape: f32[2,16,32], index: 0, kind: input, shape index: {}]
  %s1 = inlined_call_operand.hbm [shape: bf16[128,768], index: 1, kind: input, shape index: {}]
  %s2 = inlined_call_operand.vmem [shape: f32[1,128], index: 2, kind: input, shape index: {}]
  %s3 = inlined_call_operand.hbm [shape: bf16[128,128], index: 3, kind: input, shape index: {}]
  %s4 = inlined_call_operand.vmem [shape: f32[1,128], index: 4, kind: input, shape index: {}]
  %s5 = inlined_call_operand.vmem [shape: f32[14,128], index: 5, kind: input, shape index: {}]
  %s6 = inlined_call_operand.hbm [shape: f32[2,128], index: 6, kind: output, shape index: {}]
  %s7 = sld [smem:[#allocation0]]
  $region46: #{tpu_custom_call.1} parent=0
    _
  %s9 = ssub.s32 1, %s7
  %s10 = scalar_select 0, %s9, %s7
  $region1: #{tpu_custom_call.1} parent=0
    #allocation3 [shape = 'u8[16384]{0}', space=vmem, size = 0x4000, scoped, tag = 'input window, operand 0, single buffered']
    #allocation4 [shape = 's32[1]{0}', space=sflag, size = 0x4, scoped, tag = 'scoped memory for tpu_custom_call.1']
    #allocation5 [shape = 's32[1]{0}', space=sflag, size = 0x4, scoped, tag = 'scoped memory for tpu_custom_call.1']
    #allocation6 [shape = 'u8[196608]{0}', space=vmem, size = 0x30000, scoped, tag = 'input window, operand 1, single buffered']
    #allocation7 [shape = 's32[1]{0}', space=sflag, size = 0x4, scoped, tag = 'scoped memory for tpu_custom_call.1']
    #allocation8 [shape = 'u8[32768]{0}', space=vmem, size = 0x8000, scoped, tag = 'input window, operand 3, single buffered']
    #allocation9 [shape = 'u8[1024]{0}', space=vmem, size = 0x400, scoped, tag = 'output window, operand 0, single buffered']
    %11 = vsyncpa [#allocation4], 0
    %12 = vsyncpa [#allocation7], 0
    %13 = vsyncpa [#allocation5], 0
    // Predicated region
    $region2: #{tpu_custom_call.1} parent=1 // pred_check
      _
    $region3: #{tpu_custom_call.1} parent=1 // pred_check_branch
      %15 = sbr.rel (0) target = $region5
    $region4: #{tpu_custom_call.1} parent=1 // pred_region
      %s17 = ssub.s32 512, 512
      %18 = vsyncadd [#allocation4], %s17
      %s19 = sshll.u32 [#allocation3], 4
      %s20 = int_to_ptr.vmem [resolvable:$true] %s19
      %25 = dma.hbm_to_vmem [thread:$0]  %s0, 512, %s20, [#allocation4], 128, 128, 8
    $region5: #{tpu_custom_call.1} parent=1 // pred_fallthru
      _
    // Predicated region
    $region6: #{tpu_custom_call.1} parent=1 // pred_check
      _
    $region7: #{tpu_custom_call.1} parent=1 // pred_check_branch
      %27 = sbr.rel (0) target = $region9
    $region8: #{tpu_custom_call.1} parent=1 // pred_region
      %s29 = ssub.s32 6144, 6144
      %30 = vsyncadd [#allocation7], %s29
      %s31 = sshll.u32 [#allocation6], 4
      %s32 = int_to_ptr.vmem [resolvable:$true] %s31
      %37 = dma.hbm_to_vmem [thread:$0]  %s1, 6144, %s32, [#allocation7], 384, 384, 24
    $region9: #{tpu_custom_call.1} parent=1 // pred_fallthru
      _
    // Predicated region
    $region10: #{tpu_custom_call.1} parent=1 // pred_check
      _
    $region11: #{tpu_custom_call.1} parent=1 // pred_check_branch
      %39 = sbr.rel (0) target = $region13
    $region12: #{tpu_custom_call.1} parent=1 // pred_region
      _
    $region13: #{tpu_custom_call.1} parent=1 // pred_fallthru
      _
    // Predicated region
    $region14: #{tpu_custom_call.1} parent=1 // pred_check
      _
    $region15: #{tpu_custom_call.1} parent=1 // pred_check_branch
      %41 = sbr.rel (0) target = $region17
    $region16: #{tpu_custom_call.1} parent=1 // pred_region
      %s43 = ssub.s32 1024, 1024
      %44 = vsyncadd [#allocation7], %s43
      %s45 = sshll.u32 [#allocation8], 4
      %s46 = int_to_ptr.vmem [resolvable:$true] %s45
      %51 = dma.hbm_to_vmem [thread:$0]  %s3, 1024, %s46, [#allocation7], 64, 64, 4
    $region17: #{tpu_custom_call.1} parent=1 // pred_fallthru
      _
    // Predicated region
    $region18: #{tpu_custom_call.1} parent=1 // pred_check
      _
    $region19: #{tpu_custom_call.1} parent=1 // pred_check_branch
      %53 = sbr.rel (0) target = $region21
    $region20: #{tpu_custom_call.1} parent=1 // pred_region
      _
    $region21: #{tpu_custom_call.1} parent=1 // pred_fallthru
      _
    // Predicated region
    $region22: #{tpu_custom_call.1} parent=1 // pred_check
      _
    $region23: #{tpu_custom_call.1} parent=1 // pred_check_branch
      %55 = sbr.rel (0) target = $region25
    $region24: #{tpu_custom_call.1} parent=1 // pred_region
      _
    $region25: #{tpu_custom_call.1} parent=1 // pred_fallthru
      _
    // Predicated region
    $region26: #{tpu_custom_call.1} parent=1 // pred_check
      _
    $region27: #{tpu_custom_call.1} parent=1 // pred_check_branch
      %57 = sbr.rel (0) target = $region29
    $region28: #{tpu_custom_call.1} parent=1 // pred_region
      %58 = dma.done [#allocation4], 512
    $region29: #{tpu_custom_call.1} parent=1 // pred_fallthru
      _
    // Predicated region
    $region30: #{tpu_custom_call.1} parent=1 // pred_check
      _
    $region31: #{tpu_custom_call.1} parent=1 // pred_check_branch
      %60 = sbr.rel (0) target = $region33
    $region32: #{tpu_custom_call.1} parent=1 // pred_region
      %61 = dma.done [#allocation7], 6144
    $region33: #{tpu_custom_call.1} parent=1 // pred_fallthru
      _
    // Predicated region
    $region34: #{tpu_custom_call.1} parent=1 // pred_check
      _
    $region35: #{tpu_custom_call.1} parent=1 // pred_check_branch
      %63 = sbr.rel (0) target = $region37
    $region36: #{tpu_custom_call.1} parent=1 // pred_region
      %64 = dma.done [#allocation7], 1024
    $region37: #{tpu_custom_call.1} parent=1 // pred_fallthru
      _
    %66 = vst [vmem:[#allocation2 + $0x8] sm:$0xf] 0
    %67 = vst [vmem:[#allocation2 + $0x14] sm:$0xf] 0
    %vm68 = vcmask 1043712
    %69 = vst.msk [vmem:[#allocation2] sm:$0xf] %vm68, 0
    %70 = vst.msk [vmem:[#allocation2 + $0x4] sm:$0xf] %vm68, 0
    %71 = vst.msk [vmem:[#allocation2 + $0xc] sm:$0xf] %vm68, 0
    %72 = vst.msk [vmem:[#allocation2 + $0x10] sm:$0xf] %vm68, 0
    %v73 = vld [vmem:[#allocation3] sm:$0xff]
    %v74 = vld [vmem:[#allocation3 + $0x8] sm:$0xff]
    %v75 = vld [vmem:[#allocation3 + $0x10] sm:$0xff]
    %v76 = vld [vmem:[#allocation3 + $0x18] sm:$0xff]
    %v77 = vpack.c.bf16 %v74, %v73
    %v78 = vpack.c.bf16 %v76, %v75
    %v81 = vunpack.c.l.b16 %v77
    %v82 = vunpack.c.h.b16 %v77
    %v83 = vunpack.c.l.b16 %v78
    %v84 = vunpack.c.h.b16 %v78
    %v85 = vpack.c.b16 %v81, %v81
    %v86 = vpack.c.b16 %v82, %v82
    %v87 = vpack.c.b16 %v83, %v83
    %v88 = vpack.c.b16 %v84, %v84
    %vm93 = vcmask 257024
    %94 = vst.msk [vmem:[#allocation2] sm:$0xf] %vm93, %v85
    %95 = vst.msk [vmem:[#allocation2 + $0x4] sm:$0xf] %vm93, %v86
    %96 = vst.msk [vmem:[#allocation2 + $0xc] sm:$0xf] %vm93, %v87
    %97 = vst.msk [vmem:[#allocation2 + $0x10] sm:$0xf] %vm93, %v88
    %v98 = vld [vmem:[#allocation2] sm:$0xf]
    %v99 = vld [vmem:[#allocation2 + $0x4] sm:$0xf]
    %v100 = vld [vmem:[#allocation2 + $0x8] sm:$0xf]
    %v101 = vld [vmem:[#allocation2 + $0xc] sm:$0xf]
    %v102 = vld [vmem:[#allocation2 + $0x10] sm:$0xf]
    %v103 = vld [vmem:[#allocation2 + $0x14] sm:$0xf]
    %v104 = vld [vmem:[#allocation6] sm:$0xff]
    %v105 = vld [vmem:[#allocation6 + $0x8] sm:$0xff]
    %v106 = vld [vmem:[#allocation6 + $0x10] sm:$0xff]
    %v107 = vld [vmem:[#allocation6 + $0x18] sm:$0xff]
    %v108 = vld [vmem:[#allocation6 + $0x20] sm:$0xff]
    %v109 = vld [vmem:[#allocation6 + $0x28] sm:$0xff]
    %v110 = vld [vmem:[#allocation6 + $0x30] sm:$0xff]
    %v111 = vld [vmem:[#allocation6 + $0x38] sm:$0xff]
    %v112 = vld [vmem:[#allocation6 + $0x40] sm:$0xff]
    %v113 = vld [vmem:[#allocation6 + $0x48] sm:$0xff]
    %v114 = vld [vmem:[#allocation6 + $0x50] sm:$0xff]
    %v115 = vld [vmem:[#allocation6 + $0x58] sm:$0xff]
    %v116 = vld [vmem:[#allocation6 + $0x60] sm:$0xff]
    %v117 = vld [vmem:[#allocation6 + $0x68] sm:$0xff]
    %v118 = vld [vmem:[#allocation6 + $0x70] sm:$0xff]
    %v119 = vld [vmem:[#allocation6 + $0x78] sm:$0xff]
    %v120 = vld [vmem:[#allocation6 + $0x80] sm:$0xff]
    %v121 = vld [vmem:[#allocation6 + $0x88] sm:$0xff]
    %v122 = vld [vmem:[#allocation6 + $0x90] sm:$0xff]
    %v123 = vld [vmem:[#allocation6 + $0x98] sm:$0xff]
    %v124 = vld [vmem:[#allocation6 + $0xa0] sm:$0xff]
    %v125 = vld [vmem:[#allocation6 + $0xa8] sm:$0xff]
    %v126 = vld [vmem:[#allocation6 + $0xb0] sm:$0xff]
    %v127 = vld [vmem:[#allocation6 + $0xb8] sm:$0xff]
    %v128 = vld [vmem:[#allocation6 + $0xc0] sm:$0xff]
    %v129 = vld [vmem:[#allocation6 + $0xc8] sm:$0xff]
    %v130 = vld [vmem:[#allocation6 + $0xd0] sm:$0xff]
    %v131 = vld [vmem:[#allocation6 + $0xd8] sm:$0xff]
    %v132 = vld [vmem:[#allocation6 + $0xe0] sm:$0xff]
    %v133 = vld [vmem:[#allocation6 + $0xe8] sm:$0xff]
    %v134 = vld [vmem:[#allocation6 + $0xf0] sm:$0xff]
    %v135 = vld [vmem:[#allocation6 + $0xf8] sm:$0xff]
    %v136 = vld [vmem:[#allocation6 + $0x100] sm:$0xff]
    %v137 = vld [vmem:[#allocation6 + $0x108] sm:$0xff]
    %v138 = vld [vmem:[#allocation6 + $0x110] sm:$0xff]
    %v139 = vld [vmem:[#allocation6 + $0x118] sm:$0xff]
    %v140 = vld [vmem:[#allocation6 + $0x120] sm:$0xff]
    %v141 = vld [vmem:[#allocation6 + $0x128] sm:$0xff]
    %v142 = vld [vmem:[#allocation6 + $0x130] sm:$0xff]
    %v143 = vld [vmem:[#allocation6 + $0x138] sm:$0xff]
    %v144 = vld [vmem:[#allocation6 + $0x140] sm:$0xff]
    %v145 = vld [vmem:[#allocation6 + $0x148] sm:$0xff]
    %v146 = vld [vmem:[#allocation6 + $0x150] sm:$0xff]
    %v147 = vld [vmem:[#allocation6 + $0x158] sm:$0xff]
    %v148 = vld [vmem:[#allocation6 + $0x160] sm:$0xff]
    %v149 = vld [vmem:[#allocation6 + $0x168] sm:$0xff]
    %v150 = vld [vmem:[#allocation6 + $0x170] sm:$0xff]
    %v151 = vld [vmem:[#allocation6 + $0x178] sm:$0xff]
    %v158 = vunpack.c.l.b16 %v98
    %v159 = vunpack.c.l.b16 %v99
    %v160 = vunpack.c.l.b16 %v100
    %v161 = vunpack.c.l.b16 %v101
    %v162 = vunpack.c.l.b16 %v102
    %v163 = vunpack.c.l.b16 %v103
    %v164 = vpack.c.b16 %v159, %v158
    %v165 = vpack.c.b16 %v161, %v160
    %v166 = vpack.c.b16 %v163, %v162
    %v218 = vunpack.c.l.b16 %v104
    %v219 = vunpack.c.h.b16 %v104
    %v220 = vunpack.c.l.b16 %v105
    %v221 = vunpack.c.h.b16 %v105
    %v222 = vunpack.c.l.b16 %v106
    %v223 = vunpack.c.h.b16 %v106
    %v224 = vunpack.c.l.b16 %v107
    %v225 = vunpack.c.h.b16 %v107
    %v226 = vunpack.c.l.b16 %v108
    %v227 = vunpack.c.h.b16 %v108
    %v228 = vunpack.c.l.b16 %v109
    %v229 = vunpack.c.h.b16 %v109
    %v230 = vunpack.c.l.b16 %v110
    %v231 = vunpack.c.h.b16 %v110
    %v232 = vunpack.c.l.b16 %v111
    %v233 = vunpack.c.h.b16 %v111
    %v234 = vunpack.c.l.b16 %v112
    %v235 = vunpack.c.h.b16 %v112
    %v236 = vunpack.c.l.b16 %v113
    %v237 = vunpack.c.h.b16 %v113
    %v238 = vunpack.c.l.b16 %v114
    %v239 = vunpack.c.h.b16 %v114
    %v240 = vunpack.c.l.b16 %v115
    %v241 = vunpack.c.h.b16 %v115
    %v242 = vunpack.c.l.b16 %v116
    %v243 = vunpack.c.h.b16 %v116
    %v244 = vunpack.c.l.b16 %v117
    %v245 = vunpack.c.h.b16 %v117
    %v246 = vunpack.c.l.b16 %v118
    %v247 = vunpack.c.h.b16 %v118
    %v248 = vunpack.c.l.b16 %v119
    %v249 = vunpack.c.h.b16 %v119
    %v250 = vunpack.c.l.b16 %v120
    %v251 = vunpack.c.h.b16 %v120
    %v252 = vunpack.c.l.b16 %v121
    %v253 = vunpack.c.h.b16 %v121
    %v254 = vunpack.c.l.b16 %v122
    %v255 = vunpack.c.h.b16 %v122
    %v256 = vunpack.c.l.b16 %v123
    %v257 = vunpack.c.h.b16 %v123
    %v258 = vunpack.c.l.b16 %v124
    %v259 = vunpack.c.h.b16 %v124
    %v260 = vunpack.c.l.b16 %v125
    %v261 = vunpack.c.h.b16 %v125
    %v262 = vunpack.c.l.b16 %v126
    %v263 = vunpack.c.h.b16 %v126
    %v264 = vunpack.c.l.b16 %v127
    %v265 = vunpack.c.h.b16 %v127
    %v266 = vunpack.c.l.b16 %v128
    %v267 = vunpack.c.h.b16 %v128
    %v268 = vunpack.c.l.b16 %v129
    %v269 = vunpack.c.h.b16 %v129
    %v270 = vunpack.c.l.b16 %v130
    %v271 = vunpack.c.h.b16 %v130
    %v272 = vunpack.c.l.b16 %v131
    %v273 = vunpack.c.h.b16 %v131
    %v274 = vunpack.c.l.b16 %v132
    %v275 = vunpack.c.h.b16 %v132
    %v276 = vunpack.c.l.b16 %v133
    %v277 = vunpack.c.h.b16 %v133
    %v278 = vunpack.c.l.b16 %v134
    %v279 = vunpack.c.h.b16 %v134
    %v280 = vunpack.c.l.b16 %v135
    %v281 = vunpack.c.h.b16 %v135
    %v282 = vunpack.c.l.b16 %v136
    %v283 = vunpack.c.h.b16 %v136
    %v284 = vunpack.c.l.b16 %v137
    %v285 = vunpack.c.h.b16 %v137
    %v286 = vunpack.c.l.b16 %v138
    %v287 = vunpack.c.h.b16 %v138
    %v288 = vunpack.c.l.b16 %v139
    %v289 = vunpack.c.h.b16 %v139
    %v290 = vunpack.c.l.b16 %v140
    %v291 = vunpack.c.h.b16 %v140
    %v292 = vunpack.c.l.b16 %v141
    %v293 = vunpack.c.h.b16 %v141
    %v294 = vunpack.c.l.b16 %v142
    %v295 = vunpack.c.h.b16 %v142
    %v296 = vunpack.c.l.b16 %v143
    %v297 = vunpack.c.h.b16 %v143
    %v298 = vunpack.c.l.b16 %v144
    %v299 = vunpack.c.h.b16 %v144
    %v300 = vunpack.c.l.b16 %v145
    %v301 = vunpack.c.h.b16 %v145
    %v302 = vunpack.c.l.b16 %v146
    %v303 = vunpack.c.h.b16 %v146
    %v304 = vunpack.c.l.b16 %v147
    %v305 = vunpack.c.h.b16 %v147
    %v306 = vunpack.c.l.b16 %v148
    %v307 = vunpack.c.h.b16 %v148
    %v308 = vunpack.c.l.b16 %v149
    %v309 = vunpack.c.h.b16 %v149
    %v310 = vunpack.c.l.b16 %v150
    %v311 = vunpack.c.h.b16 %v150
    %v312 = vunpack.c.l.b16 %v151
    %v313 = vunpack.c.h.b16 %v151
    %v314 = vpack.c.b16 %v224, %v218
    %v315 = vpack.c.b16 %v225, %v219
    %v316 = vpack.c.b16 %v226, %v220
    %v317 = vpack.c.b16 %v227, %v221
    %v318 = vpack.c.b16 %v228, %v222
    %v319 = vpack.c.b16 %v229, %v223
    %v320 = vpack.c.b16 %v236, %v230
    %v321 = vpack.c.b16 %v237, %v231
    %v322 = vpack.c.b16 %v238, %v232
    %v323 = vpack.c.b16 %v239, %v233
    %v324 = vpack.c.b16 %v240, %v234
    %v325 = vpack.c.b16 %v241, %v235
    %v326 = vpack.c.b16 %v248, %v242
    %v327 = vpack.c.b16 %v249, %v243
    %v328 = vpack.c.b16 %v250, %v244
    %v329 = vpack.c.b16 %v251, %v245
    %v330 = vpack.c.b16 %v252, %v246
    %v331 = vpack.c.b16 %v253, %v247
    %v332 = vpack.c.b16 %v260, %v254
    %v333 = vpack.c.b16 %v261, %v255
    %v334 = vpack.c.b16 %v262, %v256
    %v335 = vpack.c.b16 %v263, %v257
    %v336 = vpack.c.b16 %v264, %v258
    %v337 = vpack.c.b16 %v265, %v259
    %v338 = vpack.c.b16 %v272, %v266
    %v339 = vpack.c.b16 %v273, %v267
    %v340 = vpack.c.b16 %v274, %v268
    %v341 = vpack.c.b16 %v275, %v269
    %v342 = vpack.c.b16 %v276, %v270
    %v343 = vpack.c.b16 %v277, %v271
    %v344 = vpack.c.b16 %v284, %v278
    %v345 = vpack.c.b16 %v285, %v279
    %v346 = vpack.c.b16 %v286, %v280
    %v347 = vpack.c.b16 %v287, %v281
    %v348 = vpack.c.b16 %v288, %v282
    %v349 = vpack.c.b16 %v289, %v283
    %v350 = vpack.c.b16 %v296, %v290
    %v351 = vpack.c.b16 %v297, %v291
    %v352 = vpack.c.b16 %v298, %v292
    %v353 = vpack.c.b16 %v299, %v293
    %v354 = vpack.c.b16 %v300, %v294
    %v355 = vpack.c.b16 %v301, %v295
    %v356 = vpack.c.b16 %v308, %v302
    %v357 = vpack.c.b16 %v309, %v303
    %v358 = vpack.c.b16 %v310, %v304
    %v359 = vpack.c.b16 %v311, %v305
    %v360 = vpack.c.b16 %v312, %v306
    %v361 = vpack.c.b16 %v313, %v307
    %410 = vmatprep.subr.bf16.mxu0 %v315
    %411 = vmatpush1.bf16.msra.mxu0 %v314
    %412 = vmatprep.subr.bf16.mxu0 %v321
    %413 = vmatpush1.bf16.msra.mxu0 %v320
    %414 = vmatprep.subr.bf16.mxu0 %v327
    %415 = vmatpush1.bf16.msra.mxu0 %v326
    %416 = vmatprep.subr.bf16.mxu0 %v333
    %417 = vmatpush1.bf16.msra.mxu0 %v332
    %418 = vmatprep.subr.bf16.mxu0 %v339
    %419 = vmatpush1.bf16.msra.mxu0 %v338
    %420 = vmatprep.subr.bf16.mxu0 %v345
    %421 = vmatpush1.bf16.msra.mxu0 %v344
    %422 = vmatprep.subr.bf16.mxu0 %v351
    %423 = vmatpush1.bf16.msra.mxu0 %v350
    %424 = vmatprep.subr.bf16.mxu0 %v357
    %425 = vmatpush1.bf16.msra.mxu0 %v356
    %426 = vmatprep.subr.bf16.mxu0 0
    %427 = vmatpush1.bf16.msra.mxu0 0
    %428 = vmatprep.subr.bf16.mxu0 0
    %429 = vmatpush1.bf16.msra.mxu0 0
    %430 = vmatprep.subr.bf16.mxu0 0
    %431 = vmatpush1.bf16.msra.mxu0 0
    %432 = vmatprep.subr.bf16.mxu0 0
    %433 = vmatpush1.bf16.msra.mxu0 0
    %434 = vmatprep.subr.bf16.mxu0 0
    %435 = vmatpush1.bf16.msra.mxu0 0
    %436 = vmatprep.subr.bf16.mxu0 0
    %437 = vmatpush1.bf16.msra.mxu0 0
    %438 = vmatprep.subr.bf16.mxu0 0
    %439 = vmatpush1.bf16.msra.mxu0 0
    %440 = vmatprep.subr.bf16.mxu0 0
    %441 = vmatpush1.bf16.msra.mxu0 0
    %442 = vmatprep.mubr.bf16.mxu0 0
    %443 = vmatmul.mubr.bf16.gmra.mrb[0].mxu0 %v164
    %v444 = vpop.f32.mrb[0].mxu0
    %v445 = vadd.f32 0.0, %v444
    %v446 = vpop.f32.mrb[0].mxu0
    %v447 = vadd.f32 0.0, %v446
    %v448 = vpop.f32.mrb[0].mxu0
    %v449 = vadd.f32 0.0, %v448
    %v450 = vpop.f32.mrb[0].mxu0
    %v451 = vadd.f32 0.0, %v450
    %452 = vmatprep.mubr.bf16.mxu0 0
    %453 = vmatmul.mubr.bf16.gmra.mrb[0].mxu0 %v165
    %v454 = vpop.f32.mrb[0].mxu0
    %v455 = vpop.f32.mrb[0].mxu0
    %v456 = vpop.f32.mrb[0].mxu0
    %v457 = vadd.f32 0.0, %v456
    %v458 = vpop.f32.mrb[0].mxu0
    %v459 = vadd.f32 0.0, %v458
    %460 = vmatprep.mubr.bf16.mxu0 0
    %461 = vmatmul.mubr.bf16.gmra.mrb[0].mxu0 %v166
    %v462 = vpop.f32.mrb[0].mxu0
    %v463 = vadd.f32 0.0, %v462
    %v464 = vpop.f32.mrb[0].mxu0
    %v465 = vadd.f32 0.0, %v464
    %v466 = vpop.f32.mrb[0].mxu0
    %v467 = vpop.f32.mrb[0].mxu0
    %468 = vdwg.mxu0
    %469 = vmatprep.subr.bf16.mxu0 %v317
    %470 = vmatpush1.bf16.msra.mxu0 %v316
    %471 = vmatprep.subr.bf16.mxu0 %v323
    %472 = vmatpush1.bf16.msra.mxu0 %v322
    %473 = vmatprep.subr.bf16.mxu0 %v329
    %474 = vmatpush1.bf16.msra.mxu0 %v328
    %475 = vmatprep.subr.bf16.mxu0 %v335
    %476 = vmatpush1.bf16.msra.mxu0 %v334
    %477 = vmatprep.subr.bf16.mxu0 %v341
    %478 = vmatpush1.bf16.msra.mxu0 %v340
    %479 = vmatprep.subr.bf16.mxu0 %v347
    %480 = vmatpush1.bf16.msra.mxu0 %v346
    %481 = vmatprep.subr.bf16.mxu0 %v353
    %482 = vmatpush1.bf16.msra.mxu0 %v352
    %483 = vmatprep.subr.bf16.mxu0 %v359
    %484 = vmatpush1.bf16.msra.mxu0 %v358
    %485 = vmatprep.subr.bf16.mxu0 0
    %486 = vmatpush1.bf16.msra.mxu0 0
    %487 = vmatprep.subr.bf16.mxu0 0
    %488 = vmatpush1.bf16.msra.mxu0 0
    %489 = vmatprep.subr.bf16.mxu0 0
    %490 = vmatpush1.bf16.msra.mxu0 0
    %491 = vmatprep.subr.bf16.mxu0 0
    %492 = vmatpush1.bf16.msra.mxu0 0
    %493 = vmatprep.subr.bf16.mxu0 0
    %494 = vmatpush1.bf16.msra.mxu0 0
    %495 = vmatprep.subr.bf16.mxu0 0
    %496 = vmatpush1.bf16.msra.mxu0 0
    %497 = vmatprep.subr.bf16.mxu0 0
    %498 = vmatpush1.bf16.msra.mxu0 0
    %499 = vmatprep.subr.bf16.mxu0 0
    %500 = vmatpush1.bf16.msra.mxu0 0
    %501 = vmatprep.mubr.bf16.mxu0 0
    %502 = vmatmul.mubr.bf16.gmra.mrb[0].mxu0 %v164
    %v503 = vpop.f32.mrb[0].mxu0
    %v504 = vadd.f32 0.0, %v503
    %v505 = vpop.f32.mrb[0].mxu0
    %v506 = vadd.f32 0.0, %v505
    %v507 = vpop.f32.mrb[0].mxu0
    %v508 = vadd.f32 0.0, %v507
    %v509 = vpop.f32.mrb[0].mxu0
    %v510 = vadd.f32 0.0, %v509
    %511 = vmatprep.mubr.bf16.mxu0 0
    %512 = vmatmul.mubr.bf16.gmra.mrb[0].mxu0 %v165
    %v513 = vpop.f32.mrb[0].mxu0
    %v514 = vpop.f32.mrb[0].mxu0
    %v515 = vadd.f32 0.0, %v514
    %v516 = vpop.f32.mrb[0].mxu0
    %v517 = vadd.f32 0.0, %v516
    %v518 = vpop.f32.mrb[0].mxu0
    %v519 = vadd.f32 0.0, %v518
    %520 = vmatprep.mubr.bf16.mxu0 0
    %521 = vmatmul.mubr.bf16.gmra.mrb[0].mxu0 %v166
    %v522 = vpop.f32.mrb[0].mxu0
    %v523 = vadd.f32 0.0, %v522
    %v524 = vpop.f32.mrb[0].mxu0
    %v525 = vadd.f32 0.0, %v524
    %v526 = vpop.f32.mrb[0].mxu0
    %v527 = vpop.f32.mrb[0].mxu0
    %v528 = vadd.f32 0.0, %v527
    %529 = vdwg.mxu0
    %530 = vmatprep.subr.bf16.mxu0 %v319
    %531 = vmatpush1.bf16.msra.mxu0 %v318
    %532 = vmatprep.subr.bf16.mxu0 %v325
    %533 = vmatpush1.bf16.msra.mxu0 %v324
    %534 = vmatprep.subr.bf16.mxu0 %v331
    %535 = vmatpush1.bf16.msra.mxu0 %v330
    %536 = vmatprep.subr.bf16.mxu0 %v337
    %537 = vmatpush1.bf16.msra.mxu0 %v336
    %538 = vmatprep.subr.bf16.mxu0 %v343
    %539 = vmatpush1.bf16.msra.mxu0 %v342
    %540 = vmatprep.subr.bf16.mxu0 %v349
    %541 = vmatpush1.bf16.msra.mxu0 %v348
    %542 = vmatprep.subr.bf16.mxu0 %v355
    %543 = vmatpush1.bf16.msra.mxu0 %v354
    %544 = vmatprep.subr.bf16.mxu0 %v361
    %545 = vmatpush1.bf16.msra.mxu0 %v360
    %546 = vmatprep.subr.bf16.mxu0 0
    %547 = vmatpush1.bf16.msra.mxu0 0
    %548 = vmatprep.subr.bf16.mxu0 0
    %549 = vmatpush1.bf16.msra.mxu0 0
    %550 = vmatprep.subr.bf16.mxu0 0
    %551 = vmatpush1.bf16.msra.mxu0 0
    %552 = vmatprep.subr.bf16.mxu0 0
    %553 = vmatpush1.bf16.msra.mxu0 0
    %554 = vmatprep.subr.bf16.mxu0 0
    %555 = vmatpush1.bf16.msra.mxu0 0
    %556 = vmatprep.subr.bf16.mxu0 0
    %557 = vmatpush1.bf16.msra.mxu0 0
    %558 = vmatprep.subr.bf16.mxu0 0
    %559 = vmatpush1.bf16.msra.mxu0 0
    %560 = vmatprep.subr.bf16.mxu0 0
    %561 = vmatpush1.bf16.msra.mxu0 0
    %562 = vmatprep.mubr.bf16.mxu0 0
    %563 = vmatmul.mubr.bf16.gmra.mrb[0].mxu0 %v164
    %v564 = vpop.f32.mrb[0].mxu0
    %v565 = vadd.f32 0.0, %v564
    %v566 = vpop.f32.mrb[0].mxu0
    %v567 = vadd.f32 0.0, %v566
    %v568 = vpop.f32.mrb[0].mxu0
    %v569 = vadd.f32 0.0, %v568
    %v570 = vpop.f32.mrb[0].mxu0
    %v571 = vadd.f32 0.0, %v570
    %572 = vmatprep.mubr.bf16.mxu0 0
    %573 = vmatmul.mubr.bf16.gmra.mrb[0].mxu0 %v165
    %v574 = vpop.f32.mrb[0].mxu0
    %v575 = vadd.f32 0.0, %v574
    %v576 = vpop.f32.mrb[0].mxu0
    %v577 = vadd.f32 0.0, %v576
    %v578 = vpop.f32.mrb[0].mxu0
    %v579 = vadd.f32 0.0, %v578
    %v580 = vpop.f32.mrb[0].mxu0
    %v581 = vadd.f32 0.0, %v580
    %582 = vmatprep.mubr.bf16.mxu0 0
    %583 = vmatmul.mubr.bf16.gmra.mrb[0].mxu0 %v166
    %v584 = vpop.f32.mrb[0].mxu0
    %v585 = vadd.f32 0.0, %v584
    %v586 = vpop.f32.mrb[0].mxu0
    %v587 = vadd.f32 0.0, %v586
    %v588 = vpop.f32.mrb[0].mxu0
    %v589 = vadd.f32 0.0, %v588
    %v590 = vpop.f32.mrb[0].mxu0
    %v591 = vadd.f32 0.0, %v590
    %592 = vdwg.mxu0
    %vm597 = vcmask 1046528
    %v598 = vrot.slane %v447, 1
    %v599 = vrot.slane %v451, 1
    %v600 = vsel %vm597, %v598, %v599
    %v601 = vrot.slane %v459, 1
    %v602 = vrot.slane %v465, 1
    %v603 = vsel %vm597, %v601, %v602
    %v608 = vadd.f32 %v445, %v600
    %v609 = vadd.f32 %v449, %v599
    %v610 = vadd.f32 %v457, %v603
    %v611 = vadd.f32 %v463, %v602
    %vm616 = vcmask 1045504
    %v617 = vrot.slane %v504, 2
    %v618 = vrot.slane %v508, 2
    %v619 = vsel %vm616, %v617, %v618
    %v620 = vrot.slane %v517, 2
    %v621 = vrot.slane %v523, 2
    %v622 = vsel %vm616, %v620, %v621
    %v627 = vadd.f32 %v608, %v619
    %v628 = vadd.f32 %v609, %v618
    %v629 = vadd.f32 %v610, %v622
    %v630 = vadd.f32 %v611, %v621
    %vm637 = vcmask 1044480
    %v638 = vrot.slane %v506, 3
    %v639 = vrot.slane %v510, 3
    %v640 = vsel %vm637, %v638, %v639
    %v641 = vrot.slane %v515, 3
    %v642 = vsel %vm637, %v639, %v641
    %v643 = vrot.slane %v519, 3
    %v644 = vrot.slane %v525, 3
    %v645 = vsel %vm637, %v643, %v644
    %v646 = vrot.slane %v528, 3
    %v647 = vsel %vm637, %v644, %v646
    %v652 = vadd.f32 %v627, %v640
    %v653 = vadd.f32 %v628, %v642
    %v654 = vadd.f32 %v629, %v645
    %v655 = vadd.f32 %v630, %v647
    %vm662 = vcmask 1043456
    %v663 = vrot.slane %v565, 4
    %v664 = vrot.slane %v569, 4
    %v665 = vsel %vm662, %v663, %v664
    %v666 = vrot.slane %v575, 4
    %v667 = vsel %vm662, %v664, %v666
    %v668 = vrot.slane %v579, 4
    %v669 = vrot.slane %v585, 4
    %v670 = vsel %vm662, %v668, %v669
    %v671 = vrot.slane %v589, 4
    %v672 = vsel %vm662, %v669, %v671
    %v677 = vadd.f32 %v652, %v665
    %v678 = vadd.f32 %v653, %v667
    %v679 = vadd.f32 %v654, %v670
    %v680 = vadd.f32 %v655, %v672
    %vm687 = vcmask 1042432
    %v688 = vrot.slane %v567, 5
    %v689 = vrot.slane %v571, 5
    %v690 = vsel %vm687, %v688, %v689
    %v691 = vrot.slane %v577, 5
    %v692 = vsel %vm687, %v689, %v691
    %v693 = vrot.slane %v581, 5
    %v694 = vrot.slane %v587, 5
    %v695 = vsel %vm687, %v693, %v694
    %v696 = vrot.slane %v591, 5
    %v697 = vsel %vm687, %v694, %v696
    %v702 = vadd.f32 %v677, %v690
    %v703 = vadd.f32 %v678, %v692
    %v704 = vadd.f32 %v679, %v695
    %v705 = vadd.f32 %v680, %v697
    %v706 = vld [vmem:[%s5] sm:$0xff]
    %v707 = vld [vmem:[%s5 + $0x8] sm:$0x3f]
    %v708 = vadd.f32 %v702, %v706
    %v709 = vadd.f32 %v703, %v707
    %v710 = vadd.f32 %v704, %v706
    %v711 = vadd.f32 %v705, %v707
    %v712 = vsel %vm616, %v709, -inf
    %v713 = vmax.f32 %v708, %v712
    %v714 = vrot.slane %v713, 4
    %v715 = vmax.f32 %v713, %v714
    %v716 = vrot.slane %v715, 2
    %v717 = vmax.f32 %v715, %v716
    %v718 = vrot.slane %v717, 1
    %v719 = vmax.f32 %v717, %v718
    %v720 = vsel %vm616, %v711, -inf
    %v721 = vmax.f32 %v710, %v720
    %v722 = vrot.slane %v721, 4
    %v723 = vmax.f32 %v721, %v722
    %v724 = vrot.slane %v723, 2
    %v725 = vmax.f32 %v723, %v724
    %v726 = vrot.slane %v725, 1
    %v727 = vmax.f32 %v725, %v726
    %v728 = vld [vmem:[%s2] sm:$0x1]
    %v730 = vlaneseq
    %v731 = vshrl.u32 %v730, 7
    %v732 = vsub.s32 0, %v731
    %v733 = vrot.slane %v728, %v732
    %v735 = vadd.f32 %v719, %v733
    %v736 = vadd.f32 %v727, %v733
    %v737 = vpack.c.bf16 %v735, %v735
    %v738 = vpack.c.bf16 %v736, %v736
    %v739 = vld [vmem:[#allocation8] sm:$0xf]
    %v740 = vld [vmem:[#allocation8 + $0x4] sm:$0xf]
    %v741 = vld [vmem:[#allocation8 + $0x8] sm:$0xf]
    %v742 = vld [vmem:[#allocation8 + $0xc] sm:$0xf]
    %v743 = vld [vmem:[#allocation8 + $0x10] sm:$0xf]
    %v744 = vld [vmem:[#allocation8 + $0x14] sm:$0xf]
    %v745 = vld [vmem:[#allocation8 + $0x18] sm:$0xf]
    %v746 = vld [vmem:[#allocation8 + $0x1c] sm:$0xf]
    %v747 = vld [vmem:[#allocation8 + $0x20] sm:$0xf]
    %v748 = vld [vmem:[#allocation8 + $0x24] sm:$0xf]
    %v749 = vld [vmem:[#allocation8 + $0x28] sm:$0xf]
    %v750 = vld [vmem:[#allocation8 + $0x2c] sm:$0xf]
    %v751 = vld [vmem:[#allocation8 + $0x30] sm:$0xf]
    %v752 = vld [vmem:[#allocation8 + $0x34] sm:$0xf]
    %v753 = vld [vmem:[#allocation8 + $0x38] sm:$0xf]
    %v754 = vld [vmem:[#allocation8 + $0x3c] sm:$0xf]
    %v755 = vld [vmem:[%s4] sm:$0x1]
    %v757 = vlaneseq
    %v758 = vshrl.u32 %v757, 7
    %v759 = vsub.s32 0, %v758
    %v760 = vrot.slane %v755, %v759
    %v764 = vunpack.c.l.b16 %v737
    %v765 = vunpack.c.l.b16 %v738
    %v766 = vrot.slane %v765, 7
    %vm767 = vcmask 1041409
    %v768 = vsel %vm767, %v766, %v764
    %v769 = vpack.c.b16 %v768, %v768
    %v787 = vunpack.c.l.b16 %v739
    %v788 = vunpack.c.l.b16 %v740
    %v789 = vunpack.c.l.b16 %v741
    %v790 = vunpack.c.l.b16 %v742
    %v791 = vunpack.c.l.b16 %v743
    %v792 = vunpack.c.l.b16 %v744
    %v793 = vunpack.c.l.b16 %v745
    %v794 = vunpack.c.l.b16 %v746
    %v795 = vunpack.c.l.b16 %v747
    %v796 = vunpack.c.l.b16 %v748
    %v797 = vunpack.c.l.b16 %v749
    %v798 = vunpack.c.l.b16 %v750
    %v799 = vunpack.c.l.b16 %v751
    %v800 = vunpack.c.l.b16 %v752
    %v801 = vunpack.c.l.b16 %v753
    %v802 = vunpack.c.l.b16 %v754
    %v803 = vpack.c.b16 %v788, %v787
    %v804 = vpack.c.b16 %v790, %v789
    %v805 = vpack.c.b16 %v792, %v791
    %v806 = vpack.c.b16 %v794, %v793
    %v807 = vpack.c.b16 %v796, %v795
    %v808 = vpack.c.b16 %v798, %v797
    %v809 = vpack.c.b16 %v800, %v799
    %v810 = vpack.c.b16 %v802, %v801
    %819 = vmatprep.subr.bf16.mxu0 0
    %820 = vmatpush1.bf16.msra.mxu0 %v803
    %821 = vmatprep.subr.bf16.mxu0 0
    %822 = vmatpush1.bf16.msra.mxu0 %v804
    %823 = vmatprep.subr.bf16.mxu0 0
    %824 = vmatpush1.bf16.msra.mxu0 %v805
    %825 = vmatprep.subr.bf16.mxu0 0
    %826 = vmatpush1.bf16.msra.mxu0 %v806
    %827 = vmatprep.subr.bf16.mxu0 0
    %828 = vmatpush1.bf16.msra.mxu0 %v807
    %829 = vmatprep.subr.bf16.mxu0 0
    %830 = vmatpush1.bf16.msra.mxu0 %v808
    %831 = vmatprep.subr.bf16.mxu0 0
    %832 = vmatpush1.bf16.msra.mxu0 %v809
    %833 = vmatprep.subr.bf16.mxu0 0
    %834 = vmatpush1.bf16.msra.mxu0 %v810
    %835 = vmatprep.subr.bf16.mxu0 0
    %836 = vmatpush1.bf16.msra.mxu0 0
    %837 = vmatprep.subr.bf16.mxu0 0
    %838 = vmatpush1.bf16.msra.mxu0 0
    %839 = vmatprep.subr.bf16.mxu0 0
    %840 = vmatpush1.bf16.msra.mxu0 0
    %841 = vmatprep.subr.bf16.mxu0 0
    %842 = vmatpush1.bf16.msra.mxu0 0
    %843 = vmatprep.subr.bf16.mxu0 0
    %844 = vmatpush1.bf16.msra.mxu0 0
    %845 = vmatprep.subr.bf16.mxu0 0
    %846 = vmatpush1.bf16.msra.mxu0 0
    %847 = vmatprep.subr.bf16.mxu0 0
    %848 = vmatpush1.bf16.msra.mxu0 0
    %849 = vmatprep.subr.bf16.mxu0 0
    %850 = vmatpush1.bf16.msra.mxu0 0
    %851 = vmatprep.mubr.bf16.mxu0 0
    %852 = vmatmul.mubr.bf16.gmra.mrb[0].mxu0 %v769
    %v853 = vpop.f32.mrb[0].mxu0
    %v854 = vadd.f32 %v760, %v853
    %v855 = vpop.f32.mrb[0].mxu0
    %v856 = vpop.f32.mrb[0].mxu0
    %v857 = vpop.f32.mrb[0].mxu0
    %858 = vdwg.mxu0
    %859 = vst [vmem:[#allocation9] sm:$0x3] %v854
    // Predicated region
    $region38: #{tpu_custom_call.1} parent=1 // pred_check
      _
    $region39: #{tpu_custom_call.1} parent=1 // pred_check_branch
      %861 = sbr.rel (0) target = $region41
    $region40: #{tpu_custom_call.1} parent=1 // pred_region
      %s863 = ssub.s32 32, 32
      %864 = vsyncadd [#allocation5], %s863
      %s866 = sshll.u32 [#allocation9], 4
      %s867 = int_to_ptr.vmem [resolvable:$true] %s866
      %869 = dma.vmem_to_hbm [thread:$0]  %s867, 32, %s6, [#allocation5]
    $region41: #{tpu_custom_call.1} parent=1 // pred_fallthru
      _
    // Predicated region
    $region42: #{tpu_custom_call.1} parent=1 // pred_check
      _
    $region43: #{tpu_custom_call.1} parent=1 // pred_check_branch
      %871 = sbr.rel (0) target = $region45
    $region44: #{tpu_custom_call.1} parent=1 // pred_region
      %872 = dma.done [#allocation5], 32
    $region45: #{tpu_custom_call.1} parent=1 // pred_fallthru
      _
    %873 = vsyncpa [#allocation4], 1
    %874 = vsyncpa [#allocation7], 1
    %875 = vsyncpa [#allocation5], 1

</llo_original>
